<compile_context>
chip_gen: v5e
topology: v5e:2x2
jax: 0.10.0
libtpu: 0.0.40
codegen_flags: <defaults>
</compile_context>

<pallas_src>
import functools
import math

import jax
import jax.numpy as jnp
from jax.experimental import pallas as pl
from jax.experimental.pallas import tpu as pltpu


def _layernorm(x, w, b, eps=1e-5):
    # PyTorch nn.LayerNorm: biased variance over last dim, eps=1e-5.  f32 math.
    mu = jnp.mean(x, axis=-1, keepdims=True)
    var = jnp.mean((x - mu) ** 2, axis=-1, keepdims=True)
    return (x - mu) * jax.lax.rsqrt(var + eps) * w + b


def _gelu_exact(x):
    # F.gelu default (exact erf form), kept in f32.
    return 0.5 * x * (1.0 + jax.lax.erf(x * (1.0 / math.sqrt(2.0))))


def vit_block_kernel(
    x_ref,
    ln1w_ref, ln1b_ref,
    wqkv_ref, bqkv_ref,
    wo_ref, bo_ref,
    ln2w_ref, ln2b_ref,
    wup_ref, bup_ref,
    wdn_ref, bdn_ref,
    o_ref,
    *, num_heads, head_dim, batch_block, seq_len,
):
    H, Dh = num_heads, head_dim
    HD = H * Dh
    Bb, N = batch_block, seq_len
    mm_dtype = wqkv_ref.dtype            # bf16 operands for all MXU matmuls

    x = x_ref[...].astype(jnp.float32)   # (Bb, N, D)
    D = x.shape[-1]
    x2 = x.reshape(Bb * N, D)            # flatten rows: one lane-dense slab for all matmuls

    # ---- attention branch -------------------------------------------------
    xn = _layernorm(x2, ln1w_ref[...], ln1b_ref[...])

    # Fused QKV projection; softmax scale already folded into the Q columns.
    qkv = jnp.dot(xn.astype(mm_dtype), wqkv_ref[...],
                  preferred_element_type=jnp.float32) + bqkv_ref[...]
    q = qkv[:, 0 * HD:1 * HD].astype(mm_dtype)
    k = qkv[:, 1 * HD:2 * HD].astype(mm_dtype)
    v = qkv[:, 2 * HD:3 * HD].astype(mm_dtype)

    # Per-(batch, head) attention with static lane slices (no (N,H,Dh) relayouts).
    batch_outs = []
    for b in range(Bb):
        r0 = b * N
        qb = q[r0:r0 + N]
        kb = k[r0:r0 + N]
        vb = v[r0:r0 + N]
        head_outs = []
        for h in range(H):
            c0 = h * Dh
            qh = qb[:, c0:c0 + Dh]
            kh = kb[:, c0:c0 + Dh]
            vh = vb[:, c0:c0 + Dh]
            # scores = qh @ kh.T  (contract the Dh axis of both) -> (N, N), f32 accum
            s = jax.lax.dot_general(qh, kh, (((1,), (1,)), ((), ())),
                                    preferred_element_type=jnp.float32)
            m = jnp.max(s, axis=-1, keepdims=True)
            p = jnp.exp(s - m)
            denom = jnp.sum(p, axis=-1, keepdims=True)
            attn = p * pl.reciprocal(denom, approx=True)       # EUP, off VPU path
            oh = jnp.dot(attn.astype(mm_dtype), vh,
                         preferred_element_type=jnp.float32)   # (N, Dh)
            head_outs.append(oh)
        batch_outs.append(jnp.concatenate(head_outs, axis=-1))  # (N, HD)
    o_all = jnp.concatenate(batch_outs, axis=0)                 # (Bb*N, HD)

    attn_out = jnp.dot(o_all.astype(mm_dtype), wo_ref[...],
                       preferred_element_type=jnp.float32) + bo_ref[...]
    x1 = x2 + attn_out                  # residual (f32)

    # ---- FFN branch --------------------------------------------------------
    xn2 = _layernorm(x1, ln2w_ref[...], ln2b_ref[...])
    hidden = jnp.dot(xn2.astype(mm_dtype), wup_ref[...],
                     preferred_element_type=jnp.float32) + bup_ref[...]
    hidden = _gelu_exact(hidden)
    ffn_out = jnp.dot(hidden.astype(mm_dtype), wdn_ref[...],
                      preferred_element_type=jnp.float32) + bdn_ref[...]

    out = x1 + ffn_out                  # residual (f32)
    o_ref[...] = out.reshape(Bb, N, D).astype(o_ref.dtype)


def vit_block(x, params, *, num_heads, head_dim, batch_block=None,
              matmul_dtype=jnp.bfloat16):
    B, N, D = x.shape
    H, Dh = num_heads, head_dim
    if batch_block is None:
        batch_block = B                 # whole batch per step at small shapes
    assert B % batch_block == 0, "batch must be divisible by batch_block"

    scale = Dh ** (-0.5)
    # Host-side: fuse QKV and fold the softmax scale into the Q columns.
    wqkv = jnp.concatenate(
        [params["wq"] * scale, params["wk"], params["wv"]], axis=1
    ).astype(matmul_dtype)
    bqkv = jnp.concatenate(
        [params["bq"] * scale, params["bk"], params["bv"]], axis=1
    ).astype(jnp.float32)

    ordered = [
        params["ln1_w"].astype(jnp.float32), params["ln1_b"].astype(jnp.float32),
        wqkv, bqkv,
        params["wo"].astype(matmul_dtype), params["bo"].astype(jnp.float32),
        params["ln2_w"].astype(jnp.float32), params["ln2_b"].astype(jnp.float32),
        params["wup"].astype(matmul_dtype), params["bup"].astype(jnp.float32),
        params["wdn"].astype(matmul_dtype), params["bdn"].astype(jnp.float32),
    ]

    def full_spec(a):
        # small parameters: full array every grid step (constant block index)
        return pl.BlockSpec(a.shape, lambda b: (0,) * a.ndim)

    in_specs = ([pl.BlockSpec((batch_block, N, D), lambda b: (b, 0, 0))]
                + [full_spec(a) for a in ordered])

    kernel = functools.partial(
        vit_block_kernel, num_heads=H, head_dim=Dh,
        batch_block=batch_block, seq_len=N)

    return pl.pallas_call(
        kernel,
        out_shape=jax.ShapeDtypeStruct((B, N, D), x.dtype),
        grid=(B // batch_block,),
        in_specs=in_specs,
        out_specs=pl.BlockSpec((batch_block, N, D), lambda b: (b, 0, 0)),
        compiler_params=pltpu.CompilerParams(
            dimension_semantics=("parallel",),
            vmem_limit_bytes=64 * 1024 * 1024,
        ),
    )(x, *ordered)


# --------------------------- pure-JAX reference (f32) ------------------------
def vit_block_ref(x, p, *, num_heads, head_dim):
    def ln(x, w, b):
        mu = x.mean(-1, keepdims=True)
        var = ((x - mu) ** 2).mean(-1, keepdims=True)
        return (x - mu) / jnp.sqrt(var + 1e-5) * w[None, None] + b[None, None]

    B, N, D = x.shape
    H, Dh = num_heads, head_dim
    xn = ln(x, p["ln1_w"][0], p["ln1_b"][0])
    q = xn @ p["wq"] + p["bq"]
    k = xn @ p["wk"] + p["bk"]
    v = xn @ p["wv"] + p["bv"]
    q = q.reshape(B, N, H, Dh).transpose(0, 2, 1, 3)
    k = k.reshape(B, N, H, Dh).transpose(0, 2, 1, 3)
    v = v.reshape(B, N, H, Dh).transpose(0, 2, 1, 3)
    scores = jnp.einsum('bhnd,bhmd->bhnm', q, k) * (Dh ** -0.5)
    attn = jax.nn.softmax(scores, axis=-1)
    o = jnp.einsum('bhnm,bhmd->bhnd', attn, v).transpose(0, 2, 1, 3).reshape(B, N, H * Dh)
    x1 = o @ p["wo"] + p["bo"] + x
    xn2 = ln(x1, p["ln2_w"][0], p["ln2_b"][0])
    h = jax.nn.gelu(xn2 @ p["wup"] + p["bup"], approximate=False)
    return h @ p["wdn"] + p["bdn"] + x1


# ------------------------------------------------------------------------------
if __name__ == "__main__":
    # Small ViT config: emb_dim=32, num_heads=4, head_dim=8, ffn_dim=64, seq=8, batch=2
    B, N, D = 2, 8, 32
    H, Dh = 4, 8
    HD = H * Dh
    F = 64

    key = jax.random.PRNGKey(0)
    ks = jax.random.split(key, 16)

    def w(k, shape, scale=0.05):
        return (scale * jax.random.normal(k, shape)).astype(jnp.float32)

    params = {
        # layernorms (stored as (1, D) for in-kernel row broadcasting)
        "ln1_w": jnp.ones((1, D), jnp.float32),
        "ln1_b": jnp.zeros((1, D), jnp.float32),
        "ln2_w": jnp.ones((1, D), jnp.float32),
        "ln2_b": jnp.zeros((1, D), jnp.float32),
        # attention projections: (in, out), biases (1, out)
        "wq": w(ks[0], (D, HD)), "bq": w(ks[1], (1, HD)),
        "wk": w(ks[2], (D, HD)), "bk": w(ks[3], (1, HD)),
        "wv": w(ks[4], (D, HD)), "bv": w(ks[5], (1, HD)),
        "wo": w(ks[6], (HD, D)), "bo": w(ks[7], (1, D)),
        # FFN
        "wup": w(ks[8], (D, F)),  "bup": w(ks[9], (1, F)),
        "wdn": w(ks[10], (F, D)), "bdn": w(ks[11], (1, D)),
    }

    x = jax.random.normal(ks[12], (B, N, D), dtype=jnp.float32)

    out = vit_block(x, params, num_heads=H, head_dim=Dh)
    out = jax.block_until_ready(out)

    ref = vit_block_ref(x, params, num_heads=H, head_dim=Dh)
    assert out.shape == (B, N, D)
    # bf16 MXU operands (f32 accumulation) -> compare against f32 reference with a
    # correspondingly loosened tolerance.
    assert jnp.allclose(out, ref, atol=2e-2, rtol=2e-2), "mismatch vs pure-JAX reference"

    print("KERNEL_OK")
</pallas_src>

<mosaic_0001>
module attributes {stable_mosaic.version = 11 : i64} {
  func.func @vit_block_kernel(%arg0: i32, %arg1: memref<2x8x32xf32, #tpu.memory_space<vmem>>, %arg2: memref<1x32xf32, #tpu.memory_space<vmem>>, %arg3: memref<1x32xf32, #tpu.memory_space<vmem>>, %arg4: memref<32x96xbf16, #tpu.memory_space<vmem>>, %arg5: memref<1x96xf32, #tpu.memory_space<vmem>>, %arg6: memref<32x32xbf16, #tpu.memory_space<vmem>>, %arg7: memref<1x32xf32, #tpu.memory_space<vmem>>, %arg8: memref<1x32xf32, #tpu.memory_space<vmem>>, %arg9: memref<1x32xf32, #tpu.memory_space<vmem>>, %arg10: memref<32x64xbf16, #tpu.memory_space<vmem>>, %arg11: memref<1x64xf32, #tpu.memory_space<vmem>>, %arg12: memref<64x32xbf16, #tpu.memory_space<vmem>>, %arg13: memref<1x32xf32, #tpu.memory_space<vmem>>, %arg14: memref<2x8x32xf32, #tpu.memory_space<vmem>>) attributes {dimension_semantics = [#tpu.dimension_semantics<parallel>], iteration_bounds = array<i64: 1>, scalar_prefetch = 0 : i64, scratch_operands = 0 : i64, tpu.core_type = #tpu.core_type<tc>, window_params = [{transform_indices = @transform_0, window_bounds = array<i64: 2, 8, 32>}, {pipeline_mode = #tpu.pipeline_mode<synchronous>, transform_indices = @transform_1, window_bounds = array<i64: 1, 32>}, {pipeline_mode = #tpu.pipeline_mode<synchronous>, transform_indices = @transform_2, window_bounds = array<i64: 1, 32>}, {pipeline_mode = #tpu.pipeline_mode<synchronous>, transform_indices = @transform_3, window_bounds = array<i64: 32, 96>}, {pipeline_mode = #tpu.pipeline_mode<synchronous>, transform_indices = @transform_4, window_bounds = array<i64: 1, 96>}, {pipeline_mode = #tpu.pipeline_mode<synchronous>, transform_indices = @transform_5, window_bounds = array<i64: 32, 32>}, {pipeline_mode = #tpu.pipeline_mode<synchronous>, transform_indices = @transform_6, window_bounds = array<i64: 1, 32>}, {pipeline_mode = #tpu.pipeline_mode<synchronous>, transform_indices = @transform_7, window_bounds = array<i64: 1, 32>}, {pipeline_mode = #tpu.pipeline_mode<synchronous>, transform_indices = @transform_8, window_bounds = array<i64: 1, 32>}, {pipeline_mode = #tpu.pipeline_mode<synchronous>, transform_indices = @transform_9, window_bounds = array<i64: 32, 64>}, {pipeline_mode = #tpu.pipeline_mode<synchronous>, transform_indices = @transform_10, window_bounds = array<i64: 1, 64>}, {pipeline_mode = #tpu.pipeline_mode<synchronous>, transform_indices = @transform_11, window_bounds = array<i64: 64, 32>}, {pipeline_mode = #tpu.pipeline_mode<synchronous>, transform_indices = @transform_12, window_bounds = array<i64: 1, 32>}, {transform_indices = @transform_13, window_bounds = array<i64: 2, 8, 32>}]} {
    %c0 = arith.constant 0 : index
    %c0_0 = arith.constant 0 : index
    %c0_1 = arith.constant 0 : index
    %0 = vector.load %arg1[%c0, %c0_0, %c0_1] : memref<2x8x32xf32, #tpu.memory_space<vmem>>, vector<2x8x32xf32>
    %1 = vector.shape_cast %0 : vector<2x8x32xf32> to vector<16x32xf32>
    %c0_2 = arith.constant 0 : index
    %c0_3 = arith.constant 0 : index
    %2 = vector.load %arg2[%c0_2, %c0_3] : memref<1x32xf32, #tpu.memory_space<vmem>>, vector<1x32xf32>
    %c0_4 = arith.constant 0 : index
    %c0_5 = arith.constant 0 : index
    %3 = vector.load %arg3[%c0_4, %c0_5] : memref<1x32xf32, #tpu.memory_space<vmem>>, vector<1x32xf32>
    %cst = arith.constant dense<0.000000e+00> : vector<16xf32>
    %4 = vector.multi_reduction <add>, %1, %cst [1] : vector<16x32xf32> to vector<16xf32>
    %5 = vector.shape_cast %4 : vector<16xf32> to vector<16x1xf32>
    %cst_6 = arith.constant 3.200000e+01 : f32
    %6 = vector.broadcast %cst_6 : f32 to vector<16x1xf32>
    %7 = arith.divf %5, %6 : vector<16x1xf32>
    %8 = vector.broadcast %7 : vector<16x1xf32> to vector<16x32xf32>
    %9 = arith.subf %1, %8 : vector<16x32xf32>
    %10 = arith.mulf %9, %9 : vector<16x32xf32>
    %cst_7 = arith.constant dense<0.000000e+00> : vector<16xf32>
    %11 = vector.multi_reduction <add>, %10, %cst_7 [1] : vector<16x32xf32> to vector<16xf32>
    %12 = vector.shape_cast %11 : vector<16xf32> to vector<16x1xf32>
    %cst_8 = arith.constant 3.200000e+01 : f32
    %13 = vector.broadcast %cst_8 : f32 to vector<16x1xf32>
    %14 = arith.divf %12, %13 : vector<16x1xf32>
    %15 = vector.broadcast %7 : vector<16x1xf32> to vector<16x32xf32>
    %16 = arith.subf %1, %15 : vector<16x32xf32>
    %cst_9 = arith.constant 9.99999974E-6 : f32
    %17 = vector.broadcast %cst_9 : f32 to vector<16x1xf32>
    %18 = arith.addf %14, %17 : vector<16x1xf32>
    %19 = math.rsqrt %18 : vector<16x1xf32>
    %20 = vector.broadcast %19 : vector<16x1xf32> to vector<16x32xf32>
    %21 = arith.mulf %16, %20 : vector<16x32xf32>
    %22 = vector.broadcast %2 : vector<1x32xf32> to vector<16x32xf32>
    %23 = arith.mulf %21, %22 : vector<16x32xf32>
    %24 = vector.broadcast %3 : vector<1x32xf32> to vector<16x32xf32>
    %25 = arith.addf %23, %24 : vector<16x32xf32>
    %26 = arith.truncf %25 : vector<16x32xf32> to vector<16x32xbf16>
    %c0_10 = arith.constant 0 : index
    %c0_11 = arith.constant 0 : index
    %27 = vector.load %arg4[%c0_10, %c0_11] : memref<32x96xbf16, #tpu.memory_space<vmem>>, vector<32x96xbf16>
    %cst_12 = arith.constant dense<0.000000e+00> : vector<16x96xf32>
    %28 = tpu.matmul %26, %27, %cst_12 {dimension_numbers = #tpu.dot_dimension_numbers<[1], [0], [0], [1], [0, 0, 1, 1], [], []>} : vector<16x32xbf16>, vector<32x96xbf16>, vector<16x96xf32> -> vector<16x96xf32>
    %c0_13 = arith.constant 0 : index
    %c0_14 = arith.constant 0 : index
    %29 = vector.load %arg5[%c0_13, %c0_14] : memref<1x96xf32, #tpu.memory_space<vmem>>, vector<1x96xf32>
    %30 = vector.broadcast %29 : vector<1x96xf32> to vector<16x96xf32>
    %31 = arith.addf %28, %30 : vector<16x96xf32>
    %32 = vector.extract_strided_slice %31 {offsets = [0, 0], sizes = [16, 32], strides = [1, 1]} : vector<16x96xf32> to vector<16x32xf32>
    %33 = arith.truncf %32 : vector<16x32xf32> to vector<16x32xbf16>
    %34 = vector.extract_strided_slice %31 {offsets = [0, 32], sizes = [16, 32], strides = [1, 1]} : vector<16x96xf32> to vector<16x32xf32>
    %35 = arith.truncf %34 : vector<16x32xf32> to vector<16x32xbf16>
    %36 = vector.extract_strided_slice %31 {offsets = [0, 64], sizes = [16, 32], strides = [1, 1]} : vector<16x96xf32> to vector<16x32xf32>
    %37 = arith.truncf %36 : vector<16x32xf32> to vector<16x32xbf16>
    %38 = vector.extract_strided_slice %33 {offsets = [0, 0], sizes = [8, 32], strides = [1, 1]} : vector<16x32xbf16> to vector<8x32xbf16>
    %39 = vector.extract_strided_slice %35 {offsets = [0, 0], sizes = [8, 32], strides = [1, 1]} : vector<16x32xbf16> to vector<8x32xbf16>
    %40 = vector.extract_strided_slice %37 {offsets = [0, 0], sizes = [8, 32], strides = [1, 1]} : vector<16x32xbf16> to vector<8x32xbf16>
    %41 = vector.extract_strided_slice %38 {offsets = [0, 0], sizes = [8, 8], strides = [1, 1]} : vector<8x32xbf16> to vector<8x8xbf16>
    %42 = vector.extract_strided_slice %39 {offsets = [0, 0], sizes = [8, 8], strides = [1, 1]} : vector<8x32xbf16> to vector<8x8xbf16>
    %43 = vector.extract_strided_slice %40 {offsets = [0, 0], sizes = [8, 8], strides = [1, 1]} : vector<8x32xbf16> to vector<8x8xbf16>
    %cst_15 = arith.constant dense<0.000000e+00> : vector<8x8xf32>
    %44 = tpu.matmul %41, %42, %cst_15 {dimension_numbers = #tpu.dot_dimension_numbers<[1], [1], [0], [0], [0, 0, 1, 0], [], []>} : vector<8x8xbf16>, vector<8x8xbf16>, vector<8x8xf32> -> vector<8x8xf32>
    %cst_16 = arith.constant dense<0xFF800000> : vector<8xf32>
    %45 = vector.multi_reduction <maximumf>, %44, %cst_16 [1] : vector<8x8xf32> to vector<8xf32>
    %46 = vector.shape_cast %45 : vector<8xf32> to vector<8x1xf32>
    %47 = vector.broadcast %46 : vector<8x1xf32> to vector<8x8xf32>
    %48 = arith.subf %44, %47 : vector<8x8xf32>
    %49 = math.exp %48 : vector<8x8xf32>
    %cst_17 = arith.constant dense<0.000000e+00> : vector<8xf32>
    %50 = vector.multi_reduction <add>, %49, %cst_17 [1] : vector<8x8xf32> to vector<8xf32>
    %51 = vector.shape_cast %50 : vector<8xf32> to vector<8x1xf32>
    %52 = tpu.reciprocal %51 {approx = true} : vector<8x1xf32> -> vector<8x1xf32>
    %53 = vector.broadcast %52 : vector<8x1xf32> to vector<8x8xf32>
    %54 = arith.mulf %49, %53 : vector<8x8xf32>
    %55 = arith.truncf %54 : vector<8x8xf32> to vector<8x8xbf16>
    %cst_18 = arith.constant dense<0.000000e+00> : vector<8x8xf32>
    %56 = tpu.matmul %55, %43, %cst_18 {dimension_numbers = #tpu.dot_dimension_numbers<[1], [0], [0], [1], [0, 0, 1, 1], [], []>} : vector<8x8xbf16>, vector<8x8xbf16>, vector<8x8xf32> -> vector<8x8xf32>
    %57 = vector.extract_strided_slice %38 {offsets = [0, 8], sizes = [8, 8], strides = [1, 1]} : vector<8x32xbf16> to vector<8x8xbf16>
    %58 = vector.extract_strided_slice %39 {offsets = [0, 8], sizes = [8, 8], strides = [1, 1]} : vector<8x32xbf16> to vector<8x8xbf16>
    %59 = vector.extract_strided_slice %40 {offsets = [0, 8], sizes = [8, 8], strides = [1, 1]} : vector<8x32xbf16> to vector<8x8xbf16>
    %cst_19 = arith.constant dense<0.000000e+00> : vector<8x8xf32>
    %60 = tpu.matmul %57, %58, %cst_19 {dimension_numbers = #tpu.dot_dimension_numbers<[1], [1], [0], [0], [0, 0, 1, 0], [], []>} : vector<8x8xbf16>, vector<8x8xbf16>, vector<8x8xf32> -> vector<8x8xf32>
    %cst_20 = arith.constant dense<0xFF800000> : vector<8xf32>
    %61 = vector.multi_reduction <maximumf>, %60, %cst_20 [1] : vector<8x8xf32> to vector<8xf32>
    %62 = vector.shape_cast %61 : vector<8xf32> to vector<8x1xf32>
    %63 = vector.broadcast %62 : vector<8x1xf32> to vector<8x8xf32>
    %64 = arith.subf %60, %63 : vector<8x8xf32>
    %65 = math.exp %64 : vector<8x8xf32>
    %cst_21 = arith.constant dense<0.000000e+00> : vector<8xf32>
    %66 = vector.multi_reduction <add>, %65, %cst_21 [1] : vector<8x8xf32> to vector<8xf32>
    %67 = vector.shape_cast %66 : vector<8xf32> to vector<8x1xf32>
    %68 = tpu.reciprocal %67 {approx = true} : vector<8x1xf32> -> vector<8x1xf32>
    %69 = vector.broadcast %68 : vector<8x1xf32> to vector<8x8xf32>
    %70 = arith.mulf %65, %69 : vector<8x8xf32>
    %71 = arith.truncf %70 : vector<8x8xf32> to vector<8x8xbf16>
    %cst_22 = arith.constant dense<0.000000e+00> : vector<8x8xf32>
    %72 = tpu.matmul %71, %59, %cst_22 {dimension_numbers = #tpu.dot_dimension_numbers<[1], [0], [0], [1], [0, 0, 1, 1], [], []>} : vector<8x8xbf16>, vector<8x8xbf16>, vector<8x8xf32> -> vector<8x8xf32>
    %73 = vector.extract_strided_slice %38 {offsets = [0, 16], sizes = [8, 8], strides = [1, 1]} : vector<8x32xbf16> to vector<8x8xbf16>
    %74 = vector.extract_strided_slice %39 {offsets = [0, 16], sizes = [8, 8], strides = [1, 1]} : vector<8x32xbf16> to vector<8x8xbf16>
    %75 = vector.extract_strided_slice %40 {offsets = [0, 16], sizes = [8, 8], strides = [1, 1]} : vector<8x32xbf16> to vector<8x8xbf16>
    %cst_23 = arith.constant dense<0.000000e+00> : vector<8x8xf32>
    %76 = tpu.matmul %73, %74, %cst_23 {dimension_numbers = #tpu.dot_dimension_numbers<[1], [1], [0], [0], [0, 0, 1, 0], [], []>} : vector<8x8xbf16>, vector<8x8xbf16>, vector<8x8xf32> -> vector<8x8xf32>
    %cst_24 = arith.constant dense<0xFF800000> : vector<8xf32>
    %77 = vector.multi_reduction <maximumf>, %76, %cst_24 [1] : vector<8x8xf32> to vector<8xf32>
    %78 = vector.shape_cast %77 : vector<8xf32> to vector<8x1xf32>
    %79 = vector.broadcast %78 : vector<8x1xf32> to vector<8x8xf32>
    %80 = arith.subf %76, %79 : vector<8x8xf32>
    %81 = math.exp %80 : vector<8x8xf32>
    %cst_25 = arith.constant dense<0.000000e+00> : vector<8xf32>
    %82 = vector.multi_reduction <add>, %81, %cst_25 [1] : vector<8x8xf32> to vector<8xf32>
    %83 = vector.shape_cast %82 : vector<8xf32> to vector<8x1xf32>
    %84 = tpu.reciprocal %83 {approx = true} : vector<8x1xf32> -> vector<8x1xf32>
    %85 = vector.broadcast %84 : vector<8x1xf32> to vector<8x8xf32>
    %86 = arith.mulf %81, %85 : vector<8x8xf32>
    %87 = arith.truncf %86 : vector<8x8xf32> to vector<8x8xbf16>
    %cst_26 = arith.constant dense<0.000000e+00> : vector<8x8xf32>
    %88 = tpu.matmul %87, %75, %cst_26 {dimension_numbers = #tpu.dot_dimension_numbers<[1], [0], [0], [1], [0, 0, 1, 1], [], []>} : vector<8x8xbf16>, vector<8x8xbf16>, vector<8x8xf32> -> vector<8x8xf32>
    %89 = vector.extract_strided_slice %38 {offsets = [0, 24], sizes = [8, 8], strides = [1, 1]} : vector<8x32xbf16> to vector<8x8xbf16>
    %90 = vector.extract_strided_slice %39 {offsets = [0, 24], sizes = [8, 8], strides = [1, 1]} : vector<8x32xbf16> to vector<8x8xbf16>
    %91 = vector.extract_strided_slice %40 {offsets = [0, 24], sizes = [8, 8], strides = [1, 1]} : vector<8x32xbf16> to vector<8x8xbf16>
    %cst_27 = arith.constant dense<0.000000e+00> : vector<8x8xf32>
    %92 = tpu.matmul %89, %90, %cst_27 {dimension_numbers = #tpu.dot_dimension_numbers<[1], [1], [0], [0], [0, 0, 1, 0], [], []>} : vector<8x8xbf16>, vector<8x8xbf16>, vector<8x8xf32> -> vector<8x8xf32>
    %cst_28 = arith.constant dense<0xFF800000> : vector<8xf32>
    %93 = vector.multi_reduction <maximumf>, %92, %cst_28 [1] : vector<8x8xf32> to vector<8xf32>
    %94 = vector.shape_cast %93 : vector<8xf32> to vector<8x1xf32>
    %95 = vector.broadcast %94 : vector<8x1xf32> to vector<8x8xf32>
    %96 = arith.subf %92, %95 : vector<8x8xf32>
    %97 = math.exp %96 : vector<8x8xf32>
    %cst_29 = arith.constant dense<0.000000e+00> : vector<8xf32>
    %98 = vector.multi_reduction <add>, %97, %cst_29 [1] : vector<8x8xf32> to vector<8xf32>
    %99 = vector.shape_cast %98 : vector<8xf32> to vector<8x1xf32>
    %100 = tpu.reciprocal %99 {approx = true} : vector<8x1xf32> -> vector<8x1xf32>
    %101 = vector.broadcast %100 : vector<8x1xf32> to vector<8x8xf32>
    %102 = arith.mulf %97, %101 : vector<8x8xf32>
    %103 = arith.truncf %102 : vector<8x8xf32> to vector<8x8xbf16>
    %cst_30 = arith.constant dense<0.000000e+00> : vector<8x8xf32>
    %104 = tpu.matmul %103, %91, %cst_30 {dimension_numbers = #tpu.dot_dimension_numbers<[1], [0], [0], [1], [0, 0, 1, 1], [], []>} : vector<8x8xbf16>, vector<8x8xbf16>, vector<8x8xf32> -> vector<8x8xf32>
    %105 = tpu.concatenate %56, %72, %88, %104 in 1 : vector<8x8xf32>, vector<8x8xf32>, vector<8x8xf32>, vector<8x8xf32> -> vector<8x32xf32>
    %106 = vector.extract_strided_slice %33 {offsets = [8, 0], sizes = [8, 32], strides = [1, 1]} : vector<16x32xbf16> to vector<8x32xbf16>
    %107 = vector.extract_strided_slice %35 {offsets = [8, 0], sizes = [8, 32], strides = [1, 1]} : vector<16x32xbf16> to vector<8x32xbf16>
    %108 = vector.extract_strided_slice %37 {offsets = [8, 0], sizes = [8, 32], strides = [1, 1]} : vector<16x32xbf16> to vector<8x32xbf16>
    %109 = vector.extract_strided_slice %106 {offsets = [0, 0], sizes = [8, 8], strides = [1, 1]} : vector<8x32xbf16> to vector<8x8xbf16>
    %110 = vector.extract_strided_slice %107 {offsets = [0, 0], sizes = [8, 8], strides = [1, 1]} : vector<8x32xbf16> to vector<8x8xbf16>
    %111 = vector.extract_strided_slice %108 {offsets = [0, 0], sizes = [8, 8], strides = [1, 1]} : vector<8x32xbf16> to vector<8x8xbf16>
    %cst_31 = arith.constant dense<0.000000e+00> : vector<8x8xf32>
    %112 = tpu.matmul %109, %110, %cst_31 {dimension_numbers = #tpu.dot_dimension_numbers<[1], [1], [0], [0], [0, 0, 1, 0], [], []>} : vector<8x8xbf16>, vector<8x8xbf16>, vector<8x8xf32> -> vector<8x8xf32>
    %cst_32 = arith.constant dense<0xFF800000> : vector<8xf32>
    %113 = vector.multi_reduction <maximumf>, %112, %cst_32 [1] : vector<8x8xf32> to vector<8xf32>
    %114 = vector.shape_cast %113 : vector<8xf32> to vector<8x1xf32>
    %115 = vector.broadcast %114 : vector<8x1xf32> to vector<8x8xf32>
    %116 = arith.subf %112, %115 : vector<8x8xf32>
    %117 = math.exp %116 : vector<8x8xf32>
    %cst_33 = arith.constant dense<0.000000e+00> : vector<8xf32>
    %118 = vector.multi_reduction <add>, %117, %cst_33 [1] : vector<8x8xf32> to vector<8xf32>
    %119 = vector.shape_cast %118 : vector<8xf32> to vector<8x1xf32>
    %120 = tpu.reciprocal %119 {approx = true} : vector<8x1xf32> -> vector<8x1xf32>
    %121 = vector.broadcast %120 : vector<8x1xf32> to vector<8x8xf32>
    %122 = arith.mulf %117, %121 : vector<8x8xf32>
    %123 = arith.truncf %122 : vector<8x8xf32> to vector<8x8xbf16>
    %cst_34 = arith.constant dense<0.000000e+00> : vector<8x8xf32>
    %124 = tpu.matmul %123, %111, %cst_34 {dimension_numbers = #tpu.dot_dimension_numbers<[1], [0], [0], [1], [0, 0, 1, 1], [], []>} : vector<8x8xbf16>, vector<8x8xbf16>, vector<8x8xf32> -> vector<8x8xf32>
    %125 = vector.extract_strided_slice %106 {offsets = [0, 8], sizes = [8, 8], strides = [1, 1]} : vector<8x32xbf16> to vector<8x8xbf16>
    %126 = vector.extract_strided_slice %107 {offsets = [0, 8], sizes = [8, 8], strides = [1, 1]} : vector<8x32xbf16> to vector<8x8xbf16>
    %127 = vector.extract_strided_slice %108 {offsets = [0, 8], sizes = [8, 8], strides = [1, 1]} : vector<8x32xbf16> to vector<8x8xbf16>
    %cst_35 = arith.constant dense<0.000000e+00> : vector<8x8xf32>
    %128 = tpu.matmul %125, %126, %cst_35 {dimension_numbers = #tpu.dot_dimension_numbers<[1], [1], [0], [0], [0, 0, 1, 0], [], []>} : vector<8x8xbf16>, vector<8x8xbf16>, vector<8x8xf32> -> vector<8x8xf32>
    %cst_36 = arith.constant dense<0xFF800000> : vector<8xf32>
    %129 = vector.multi_reduction <maximumf>, %128, %cst_36 [1] : vector<8x8xf32> to vector<8xf32>
    %130 = vector.shape_cast %129 : vector<8xf32> to vector<8x1xf32>
    %131 = vector.broadcast %130 : vector<8x1xf32> to vector<8x8xf32>
    %132 = arith.subf %128, %131 : vector<8x8xf32>
    %133 = math.exp %132 : vector<8x8xf32>
    %cst_37 = arith.constant dense<0.000000e+00> : vector<8xf32>
    %134 = vector.multi_reduction <add>, %133, %cst_37 [1] : vector<8x8xf32> to vector<8xf32>
    %135 = vector.shape_cast %134 : vector<8xf32> to vector<8x1xf32>
    %136 = tpu.reciprocal %135 {approx = true} : vector<8x1xf32> -> vector<8x1xf32>
    %137 = vector.broadcast %136 : vector<8x1xf32> to vector<8x8xf32>
    %138 = arith.mulf %133, %137 : vector<8x8xf32>
    %139 = arith.truncf %138 : vector<8x8xf32> to vector<8x8xbf16>
    %cst_38 = arith.constant dense<0.000000e+00> : vector<8x8xf32>
    %140 = tpu.matmul %139, %127, %cst_38 {dimension_numbers = #tpu.dot_dimension_numbers<[1], [0], [0], [1], [0, 0, 1, 1], [], []>} : vector<8x8xbf16>, vector<8x8xbf16>, vector<8x8xf32> -> vector<8x8xf32>
    %141 = vector.extract_strided_slice %106 {offsets = [0, 16], sizes = [8, 8], strides = [1, 1]} : vector<8x32xbf16> to vector<8x8xbf16>
    %142 = vector.extract_strided_slice %107 {offsets = [0, 16], sizes = [8, 8], strides = [1, 1]} : vector<8x32xbf16> to vector<8x8xbf16>
    %143 = vector.extract_strided_slice %108 {offsets = [0, 16], sizes = [8, 8], strides = [1, 1]} : vector<8x32xbf16> to vector<8x8xbf16>
    %cst_39 = arith.constant dense<0.000000e+00> : vector<8x8xf32>
    %144 = tpu.matmul %141, %142, %cst_39 {dimension_numbers = #tpu.dot_dimension_numbers<[1], [1], [0], [0], [0, 0, 1, 0], [], []>} : vector<8x8xbf16>, vector<8x8xbf16>, vector<8x8xf32> -> vector<8x8xf32>
    %cst_40 = arith.constant dense<0xFF800000> : vector<8xf32>
    %145 = vector.multi_reduction <maximumf>, %144, %cst_40 [1] : vector<8x8xf32> to vector<8xf32>
    %146 = vector.shape_cast %145 : vector<8xf32> to vector<8x1xf32>
    %147 = vector.broadcast %146 : vector<8x1xf32> to vector<8x8xf32>
    %148 = arith.subf %144, %147 : vector<8x8xf32>
    %149 = math.exp %148 : vector<8x8xf32>
    %cst_41 = arith.constant dense<0.000000e+00> : vector<8xf32>
    %150 = vector.multi_reduction <add>, %149, %cst_41 [1] : vector<8x8xf32> to vector<8xf32>
    %151 = vector.shape_cast %150 : vector<8xf32> to vector<8x1xf32>
    %152 = tpu.reciprocal %151 {approx = true} : vector<8x1xf32> -> vector<8x1xf32>
    %153 = vector.broadcast %152 : vector<8x1xf32> to vector<8x8xf32>
    %154 = arith.mulf %149, %153 : vector<8x8xf32>
    %155 = arith.truncf %154 : vector<8x8xf32> to vector<8x8xbf16>
    %cst_42 = arith.constant dense<0.000000e+00> : vector<8x8xf32>
    %156 = tpu.matmul %155, %143, %cst_42 {dimension_numbers = #tpu.dot_dimension_numbers<[1], [0], [0], [1], [0, 0, 1, 1], [], []>} : vector<8x8xbf16>, vector<8x8xbf16>, vector<8x8xf32> -> vector<8x8xf32>
    %157 = vector.extract_strided_slice %106 {offsets = [0, 24], sizes = [8, 8], strides = [1, 1]} : vector<8x32xbf16> to vector<8x8xbf16>
    %158 = vector.extract_strided_slice %107 {offsets = [0, 24], sizes = [8, 8], strides = [1, 1]} : vector<8x32xbf16> to vector<8x8xbf16>
    %159 = vector.extract_strided_slice %108 {offsets = [0, 24], sizes = [8, 8], strides = [1, 1]} : vector<8x32xbf16> to vector<8x8xbf16>
    %cst_43 = arith.constant dense<0.000000e+00> : vector<8x8xf32>
    %160 = tpu.matmul %157, %158, %cst_43 {dimension_numbers = #tpu.dot_dimension_numbers<[1], [1], [0], [0], [0, 0, 1, 0], [], []>} : vector<8x8xbf16>, vector<8x8xbf16>, vector<8x8xf32> -> vector<8x8xf32>
    %cst_44 = arith.constant dense<0xFF800000> : vector<8xf32>
    %161 = vector.multi_reduction <maximumf>, %160, %cst_44 [1] : vector<8x8xf32> to vector<8xf32>
    %162 = vector.shape_cast %161 : vector<8xf32> to vector<8x1xf32>
    %163 = vector.broadcast %162 : vector<8x1xf32> to vector<8x8xf32>
    %164 = arith.subf %160, %163 : vector<8x8xf32>
    %165 = math.exp %164 : vector<8x8xf32>
    %cst_45 = arith.constant dense<0.000000e+00> : vector<8xf32>
    %166 = vector.multi_reduction <add>, %165, %cst_45 [1] : vector<8x8xf32> to vector<8xf32>
    %167 = vector.shape_cast %166 : vector<8xf32> to vector<8x1xf32>
    %168 = tpu.reciprocal %167 {approx = true} : vector<8x1xf32> -> vector<8x1xf32>
    %169 = vector.broadcast %168 : vector<8x1xf32> to vector<8x8xf32>
    %170 = arith.mulf %165, %169 : vector<8x8xf32>
    %171 = arith.truncf %170 : vector<8x8xf32> to vector<8x8xbf16>
    %cst_46 = arith.constant dense<0.000000e+00> : vector<8x8xf32>
    %172 = tpu.matmul %171, %159, %cst_46 {dimension_numbers = #tpu.dot_dimension_numbers<[1], [0], [0], [1], [0, 0, 1, 1], [], []>} : vector<8x8xbf16>, vector<8x8xbf16>, vector<8x8xf32> -> vector<8x8xf32>
    %173 = tpu.concatenate %124, %140, %156, %172 in 1 : vector<8x8xf32>, vector<8x8xf32>, vector<8x8xf32>, vector<8x8xf32> -> vector<8x32xf32>
    %174 = tpu.concatenate %105, %173 in 0 : vector<8x32xf32>, vector<8x32xf32> -> vector<16x32xf32>
    %175 = arith.truncf %174 : vector<16x32xf32> to vector<16x32xbf16>
    %c0_47 = arith.constant 0 : index
    %c0_48 = arith.constant 0 : index
    %176 = vector.load %arg6[%c0_47, %c0_48] : memref<32x32xbf16, #tpu.memory_space<vmem>>, vector<32x32xbf16>
    %cst_49 = arith.constant dense<0.000000e+00> : vector<16x32xf32>
    %177 = tpu.matmul %175, %176, %cst_49 {dimension_numbers = #tpu.dot_dimension_numbers<[1], [0], [0], [1], [0, 0, 1, 1], [], []>} : vector<16x32xbf16>, vector<32x32xbf16>, vector<16x32xf32> -> vector<16x32xf32>
    %c0_50 = arith.constant 0 : index
    %c0_51 = arith.constant 0 : index
    %178 = vector.load %arg7[%c0_50, %c0_51] : memref<1x32xf32, #tpu.memory_space<vmem>>, vector<1x32xf32>
    %179 = vector.broadcast %178 : vector<1x32xf32> to vector<16x32xf32>
    %180 = arith.addf %177, %179 : vector<16x32xf32>
    %181 = arith.addf %1, %180 : vector<16x32xf32>
    %c0_52 = arith.constant 0 : index
    %c0_53 = arith.constant 0 : index
    %182 = vector.load %arg8[%c0_52, %c0_53] : memref<1x32xf32, #tpu.memory_space<vmem>>, vector<1x32xf32>
    %c0_54 = arith.constant 0 : index
    %c0_55 = arith.constant 0 : index
    %183 = vector.load %arg9[%c0_54, %c0_55] : memref<1x32xf32, #tpu.memory_space<vmem>>, vector<1x32xf32>
    %cst_56 = arith.constant dense<0.000000e+00> : vector<16xf32>
    %184 = vector.multi_reduction <add>, %181, %cst_56 [1] : vector<16x32xf32> to vector<16xf32>
    %185 = vector.shape_cast %184 : vector<16xf32> to vector<16x1xf32>
    %cst_57 = arith.constant 3.200000e+01 : f32
    %186 = vector.broadcast %cst_57 : f32 to vector<16x1xf32>
    %187 = arith.divf %185, %186 : vector<16x1xf32>
    %188 = vector.broadcast %187 : vector<16x1xf32> to vector<16x32xf32>
    %189 = arith.subf %181, %188 : vector<16x32xf32>
    %190 = arith.mulf %189, %189 : vector<16x32xf32>
    %cst_58 = arith.constant dense<0.000000e+00> : vector<16xf32>
    %191 = vector.multi_reduction <add>, %190, %cst_58 [1] : vector<16x32xf32> to vector<16xf32>
    %192 = vector.shape_cast %191 : vector<16xf32> to vector<16x1xf32>
    %cst_59 = arith.constant 3.200000e+01 : f32
    %193 = vector.broadcast %cst_59 : f32 to vector<16x1xf32>
    %194 = arith.divf %192, %193 : vector<16x1xf32>
    %195 = vector.broadcast %187 : vector<16x1xf32> to vector<16x32xf32>
    %196 = arith.subf %181, %195 : vector<16x32xf32>
    %cst_60 = arith.constant 9.99999974E-6 : f32
    %197 = vector.broadcast %cst_60 : f32 to vector<16x1xf32>
    %198 = arith.addf %194, %197 : vector<16x1xf32>
    %199 = math.rsqrt %198 : vector<16x1xf32>
    %200 = vector.broadcast %199 : vector<16x1xf32> to vector<16x32xf32>
    %201 = arith.mulf %196, %200 : vector<16x32xf32>
    %202 = vector.broadcast %182 : vector<1x32xf32> to vector<16x32xf32>
    %203 = arith.mulf %201, %202 : vector<16x32xf32>
    %204 = vector.broadcast %183 : vector<1x32xf32> to vector<16x32xf32>
    %205 = arith.addf %203, %204 : vector<16x32xf32>
    %206 = arith.truncf %205 : vector<16x32xf32> to vector<16x32xbf16>
    %c0_61 = arith.constant 0 : index
    %c0_62 = arith.constant 0 : index
    %207 = vector.load %arg10[%c0_61, %c0_62] : memref<32x64xbf16, #tpu.memory_space<vmem>>, vector<32x64xbf16>
    %cst_63 = arith.constant dense<0.000000e+00> : vector<16x64xf32>
    %208 = tpu.matmul %206, %207, %cst_63 {dimension_numbers = #tpu.dot_dimension_numbers<[1], [0], [0], [1], [0, 0, 1, 1], [], []>} : vector<16x32xbf16>, vector<32x64xbf16>, vector<16x64xf32> -> vector<16x64xf32>
    %c0_64 = arith.constant 0 : index
    %c0_65 = arith.constant 0 : index
    %209 = vector.load %arg11[%c0_64, %c0_65] : memref<1x64xf32, #tpu.memory_space<vmem>>, vector<1x64xf32>
    %210 = vector.broadcast %209 : vector<1x64xf32> to vector<16x64xf32>
    %211 = arith.addf %208, %210 : vector<16x64xf32>
    %cst_66 = arith.constant 5.000000e-01 : f32
    %212 = vector.broadcast %cst_66 : f32 to vector<16x64xf32>
    %213 = arith.mulf %212, %211 : vector<16x64xf32>
    %cst_67 = arith.constant 0.707106769 : f32
    %214 = vector.broadcast %cst_67 : f32 to vector<16x64xf32>
    %215 = arith.mulf %211, %214 : vector<16x64xf32>
    %216 = math.erf %215 : vector<16x64xf32>
    %cst_68 = arith.constant 1.000000e+00 : f32
    %217 = vector.broadcast %cst_68 : f32 to vector<16x64xf32>
    %218 = arith.addf %217, %216 : vector<16x64xf32>
    %219 = arith.mulf %213, %218 : vector<16x64xf32>
    %220 = arith.truncf %219 : vector<16x64xf32> to vector<16x64xbf16>
    %c0_69 = arith.constant 0 : index
    %c0_70 = arith.constant 0 : index
    %221 = vector.load %arg12[%c0_69, %c0_70] : memref<64x32xbf16, #tpu.memory_space<vmem>>, vector<64x32xbf16>
    %cst_71 = arith.constant dense<0.000000e+00> : vector<16x32xf32>
    %222 = tpu.matmul %220, %221, %cst_71 {dimension_numbers = #tpu.dot_dimension_numbers<[1], [0], [0], [1], [0, 0, 1, 1], [], []>} : vector<16x64xbf16>, vector<64x32xbf16>, vector<16x32xf32> -> vector<16x32xf32>
    %c0_72 = arith.constant 0 : index
    %c0_73 = arith.constant 0 : index
    %223 = vector.load %arg13[%c0_72, %c0_73] : memref<1x32xf32, #tpu.memory_space<vmem>>, vector<1x32xf32>
    %224 = vector.broadcast %223 : vector<1x32xf32> to vector<16x32xf32>
    %225 = arith.addf %222, %224 : vector<16x32xf32>
    %226 = arith.addf %181, %225 : vector<16x32xf32>
    %227 = vector.shape_cast %226 : vector<16x32xf32> to vector<2x8x32xf32>
    %c0_74 = arith.constant 0 : index
    %c0_75 = arith.constant 0 : index
    %c0_76 = arith.constant 0 : index
    %228 = vector.load %arg14[%c0_74, %c0_75, %c0_76] : memref<2x8x32xf32, #tpu.memory_space<vmem>>, vector<2x8x32xf32>
    tpu.vector_store %arg14[%c0_74, %c0_75, %c0_76], %227 {strides = array<i32>} : memref<2x8x32xf32, #tpu.memory_space<vmem>>, vector<2x8x32xf32>,
    return
  }
  func.func @transform_0(%arg0: i32) -> (i32, i32, i32) {
    %c0_i32 = arith.constant 0 : i32
    %c0_i32_0 = arith.constant 0 : i32
    %c0_i32_1 = arith.constant 0 : i32
    return %arg0, %c0_i32, %c0_i32_0 : i32, i32, i32
  }
  func.func @transform_1(%arg0: i32) -> (i32, i32) {
    %c0_i32 = arith.constant 0 : i32
    %c0_i32_0 = arith.constant 0 : i32
    %c0_i32_1 = arith.constant 0 : i32
    return %c0_i32, %c0_i32_0 : i32, i32
  }
  func.func @transform_2(%arg0: i32) -> (i32, i32) {
    %c0_i32 = arith.constant 0 : i32
    %c0_i32_0 = arith.constant 0 : i32
    %c0_i32_1 = arith.constant 0 : i32
    return %c0_i32, %c0_i32_0 : i32, i32
  }
  func.func @transform_3(%arg0: i32) -> (i32, i32) {
    %c0_i32 = arith.constant 0 : i32
    %c0_i32_0 = arith.constant 0 : i32
    %c0_i32_1 = arith.constant 0 : i32
    return %c0_i32, %c0_i32_0 : i32, i32
  }
  func.func @transform_4(%arg0: i32) -> (i32, i32) {
    %c0_i32 = arith.constant 0 : i32
    %c0_i32_0 = arith.constant 0 : i32
    %c0_i32_1 = arith.constant 0 : i32
    return %c0_i32, %c0_i32_0 : i32, i32
  }
  func.func @transform_5(%arg0: i32) -> (i32, i32) {
    %c0_i32 = arith.constant 0 : i32
    %c0_i32_0 = arith.constant 0 : i32
    %c0_i32_1 = arith.constant 0 : i32
    return %c0_i32, %c0_i32_0 : i32, i32
  }
  func.func @transform_6(%arg0: i32) -> (i32, i32) {
    %c0_i32 = arith.constant 0 : i32
    %c0_i32_0 = arith.constant 0 : i32
    %c0_i32_1 = arith.constant 0 : i32
    return %c0_i32, %c0_i32_0 : i32, i32
  }
  func.func @transform_7(%arg0: i32) -> (i32, i32) {
    %c0_i32 = arith.constant 0 : i32
    %c0_i32_0 = arith.constant 0 : i32
    %c0_i32_1 = arith.constant 0 : i32
    return %c0_i32, %c0_i32_0 : i32, i32
  }
  func.func @transform_8(%arg0: i32) -> (i32, i32) {
    %c0_i32 = arith.constant 0 : i32
    %c0_i32_0 = arith.constant 0 : i32
    %c0_i32_1 = arith.constant 0 : i32
    return %c0_i32, %c0_i32_0 : i32, i32
  }
  func.func @transform_9(%arg0: i32) -> (i32, i32) {
    %c0_i32 = arith.constant 0 : i32
    %c0_i32_0 = arith.constant 0 : i32
    %c0_i32_1 = arith.constant 0 : i32
    return %c0_i32, %c0_i32_0 : i32, i32
  }
  func.func @transform_10(%arg0: i32) -> (i32, i32) {
    %c0_i32 = arith.constant 0 : i32
    %c0_i32_0 = arith.constant 0 : i32
    %c0_i32_1 = arith.constant 0 : i32
    return %c0_i32, %c0_i32_0 : i32, i32
  }
  func.func @transform_11(%arg0: i32) -> (i32, i32) {
    %c0_i32 = arith.constant 0 : i32
    %c0_i32_0 = arith.constant 0 : i32
    %c0_i32_1 = arith.constant 0 : i32
    return %c0_i32, %c0_i32_0 : i32, i32
  }
  func.func @transform_12(%arg0: i32) -> (i32, i32) {
    %c0_i32 = arith.constant 0 : i32
    %c0_i32_0 = arith.constant 0 : i32
    %c0_i32_1 = arith.constant 0 : i32
    return %c0_i32, %c0_i32_0 : i32, i32
  }
  func.func @transform_13(%arg0: i32) -> (i32, i32, i32) {
    %c0_i32 = arith.constant 0 : i32
    %c0_i32_0 = arith.constant 0 : i32
    %c0_i32_1 = arith.constant 0 : i32
    return %arg0, %c0_i32, %c0_i32_0 : i32, i32, i32
  }
}

</mosaic_0001>

<llo_original>
// kernel: tpu_custom_call.1
$region0: #{tpu_custom_call.1}
  #allocation0 [shape = 'u32[]', space=smem, size = 0x4, offset = 0x4, fixed_abs, tag = 'smem constant byte address 0x4 - core index']
  #allocation1 [shape = 'u32[72,128]{1,0:T(1,128)}', space=vmem, size = 0x9000, scoped, tag = 'internal scratch']
  %s0 = inlined_call_operand.vmem [shape: f32[2,8,32], index: 0, kind: input, shape index: {}]
  %s1 = inlined_call_operand.hbm [shape: f32[1,32], index: 1, kind: input, shape index: {}]
  %s2 = inlined_call_operand.vmem [shape: f32[1,32], index: 2, kind: input, shape index: {}]
  %s3 = inlined_call_operand.vmem [shape: bf16[32,96], index: 3, kind: input, shape index: {}]
  %s4 = inlined_call_operand.vmem [shape: f32[1,96], index: 4, kind: input, shape index: {}]
  %s5 = inlined_call_operand.vmem [shape: bf16[32,32], index: 5, kind: input, shape index: {}]
  %s6 = inlined_call_operand.vmem [shape: f32[1,32], index: 6, kind: input, shape index: {}]
  %s7 = inlined_call_operand.vmem [shape: f32[1,32], index: 7, kind: input, shape index: {}]
  %s8 = inlined_call_operand.vmem [shape: f32[1,32], index: 8, kind: input, shape index: {}]
  %s9 = inlined_call_operand.hbm [shape: bf16[32,64], index: 9, kind: input, shape index: {}]
  %s10 = inlined_call_operand.vmem [shape: f32[1,64], index: 10, kind: input, shape index: {}]
  %s11 = inlined_call_operand.vmem [shape: bf16[64,32], index: 11, kind: input, shape index: {}]
  %s12 = inlined_call_operand.vmem [shape: f32[1,32], index: 12, kind: input, shape index: {}]
  %s13 = inlined_call_operand.hbm [shape: f32[2,8,32], index: 13, kind: output, shape index: {}]
  %s14 = sld [smem:[#allocation0]]
  $region70: #{tpu_custom_call.1} parent=0
    _
  %s16 = ssub.s32 1, %s14
  %s17 = scalar_select 0, %s16, %s14
  $region1: #{tpu_custom_call.1} parent=0
    #allocation2 [shape = 'u8[512]{0}', space=vmem, size = 0x400, scoped, tag = 'input window, operand 1, single buffered']
    #allocation3 [shape = 's32[1]{0}', space=sflag, size = 0x4, scoped, tag = 'scoped memory for tpu_custom_call.1']
    #allocation4 [shape = 's32[1]{0}', space=sflag, size = 0x4, scoped, tag = 'scoped memory for tpu_custom_call.1']
    #allocation5 [shape = 'u8[8192]{0}', space=vmem, size = 0x2000, scoped, tag = 'input window, operand 9, single buffered']
    #allocation6 [shape = 's32[1]{0}', space=sflag, size = 0x4, scoped, tag = 'scoped memory for tpu_custom_call.1']
    #allocation7 [shape = 'u8[8192]{0}', space=vmem, size = 0x2000, scoped, tag = 'output window, operand 0, single buffered']
    %18 = vsyncpa [#allocation3], 0
    %19 = vsyncpa [#allocation6], 0
    %20 = vsyncpa [#allocation4], 0
    // Predicated region
    $region2: #{tpu_custom_call.1} parent=1 // pred_check
      _
    $region3: #{tpu_custom_call.1} parent=1 // pred_check_branch
      %22 = sbr.rel (0) target = $region5
    $region4: #{tpu_custom_call.1} parent=1 // pred_region
      _
    $region5: #{tpu_custom_call.1} parent=1 // pred_fallthru
      _
    // Predicated region
    $region6: #{tpu_custom_call.1} parent=1 // pred_check
      _
    $region7: #{tpu_custom_call.1} parent=1 // pred_check_branch
      %24 = sbr.rel (0) target = $region9
    $region8: #{tpu_custom_call.1} parent=1 // pred_region
      %26 = vsyncadd [#allocation3], 0
      %s28 = sshll.u32 %s1, 4
      %s29 = int_to_ptr.hbm [resolvable:$true] %s28
      %s30 = sshll.u32 [#allocation2], 4
      %s31 = int_to_ptr.vmem [resolvable:$true] %s30
      %33 = dma.hbm_to_vmem [thread:$0]  %s29, 16, %s31, [#allocation3]
    $region9: #{tpu_custom_call.1} parent=1 // pred_fallthru
      _
    // Predicated region
    $region10: #{tpu_custom_call.1} parent=1 // pred_check
      _
    $region11: #{tpu_custom_call.1} parent=1 // pred_check_branch
      %35 = sbr.rel (0) target = $region13
    $region12: #{tpu_custom_call.1} parent=1 // pred_region
      _
    $region13: #{tpu_custom_call.1} parent=1 // pred_fallthru
      _
    // Predicated region
    $region14: #{tpu_custom_call.1} parent=1 // pred_check
      _
    $region15: #{tpu_custom_call.1} parent=1 // pred_check_branch
      %37 = sbr.rel (0) target = $region17
    $region16: #{tpu_custom_call.1} parent=1 // pred_region
      _
    $region17: #{tpu_custom_call.1} parent=1 // pred_fallthru
      _
    // Predicated region
    $region18: #{tpu_custom_call.1} parent=1 // pred_check
      _
    $region19: #{tpu_custom_call.1} parent=1 // pred_check_branch
      %39 = sbr.rel (0) target = $region21
    $region20: #{tpu_custom_call.1} parent=1 // pred_region
      _
    $region21: #{tpu_custom_call.1} parent=1 // pred_fallthru
      _
    // Predicated region
    $region22: #{tpu_custom_call.1} parent=1 // pred_check
      _
    $region23: #{tpu_custom_call.1} parent=1 // pred_check_branch
      %41 = sbr.rel (0) target = $region25
    $region24: #{tpu_custom_call.1} parent=1 // pred_region
      _
    $region25: #{tpu_custom_call.1} parent=1 // pred_fallthru
      _
    // Predicated region
    $region26: #{tpu_custom_call.1} parent=1 // pred_check
      _
    $region27: #{tpu_custom_call.1} parent=1 // pred_check_branch
      %43 = sbr.rel (0) target = $region29
    $region28: #{tpu_custom_call.1} parent=1 // pred_region
      _
    $region29: #{tpu_custom_call.1} parent=1 // pred_fallthru
      _
    // Predicated region
    $region30: #{tpu_custom_call.1} parent=1 // pred_check
      _
    $region31: #{tpu_custom_call.1} parent=1 // pred_check_branch
      %45 = sbr.rel (0) target = $region33
    $region32: #{tpu_custom_call.1} parent=1 // pred_region
      _
    $region33: #{tpu_custom_call.1} parent=1 // pred_fallthru
      _
    // Predicated region
    $region34: #{tpu_custom_call.1} parent=1 // pred_check
      _
    $region35: #{tpu_custom_call.1} parent=1 // pred_check_branch
      %47 = sbr.rel (0) target = $region37
    $region36: #{tpu_custom_call.1} parent=1 // pred_region
      _
    $region37: #{tpu_custom_call.1} parent=1 // pred_fallthru
      _
    // Predicated region
    $region38: #{tpu_custom_call.1} parent=1 // pred_check
      _
    $region39: #{tpu_custom_call.1} parent=1 // pred_check_branch
      %49 = sbr.rel (0) target = $region41
    $region40: #{tpu_custom_call.1} parent=1 // pred_region
      %51 = vsyncadd [#allocation6], 0
      %s52 = sshll.u32 %s9, 4
      %s53 = int_to_ptr.hbm [resolvable:$true] %s52
      %s54 = sshll.u32 [#allocation5], 4
      %s55 = int_to_ptr.vmem [resolvable:$true] %s54
      %60 = dma.hbm_to_vmem [thread:$0]  %s53, 256, %s55, [#allocation6], 64, 64, 4
    $region41: #{tpu_custom_call.1} parent=1 // pred_fallthru
      _
    // Predicated region
    $region42: #{tpu_custom_call.1} parent=1 // pred_check
      _
    $region43: #{tpu_custom_call.1} parent=1 // pred_check_branch
      %62 = sbr.rel (0) target = $region45
    $region44: #{tpu_custom_call.1} parent=1 // pred_region
      _
    $region45: #{tpu_custom_call.1} parent=1 // pred_fallthru
      _
    // Predicated region
    $region46: #{tpu_custom_call.1} parent=1 // pred_check
      _
    $region47: #{tpu_custom_call.1} parent=1 // pred_check_branch
      %64 = sbr.rel (0) target = $region49
    $region48: #{tpu_custom_call.1} parent=1 // pred_region
      _
    $region49: #{tpu_custom_call.1} parent=1 // pred_fallthru
      _
    // Predicated region
    $region50: #{tpu_custom_call.1} parent=1 // pred_check
      _
    $region51: #{tpu_custom_call.1} parent=1 // pred_check_branch
      %66 = sbr.rel (0) target = $region53
    $region52: #{tpu_custom_call.1} parent=1 // pred_region
      _
    $region53: #{tpu_custom_call.1} parent=1 // pred_fallthru
      _
    // Predicated region
    $region54: #{tpu_custom_call.1} parent=1 // pred_check
      _
    $region55: #{tpu_custom_call.1} parent=1 // pred_check_branch
      %68 = sbr.rel (0) target = $region57
    $region56: #{tpu_custom_call.1} parent=1 // pred_region
      %70 = dma.done [#allocation3], 16
    $region57: #{tpu_custom_call.1} parent=1 // pred_fallthru
      _
    // Predicated region
    $region58: #{tpu_custom_call.1} parent=1 // pred_check
      _
    $region59: #{tpu_custom_call.1} parent=1 // pred_check_branch
      %72 = sbr.rel (0) target = $region61
    $region60: #{tpu_custom_call.1} parent=1 // pred_region
      %74 = dma.done [#allocation6], 256
    $region61: #{tpu_custom_call.1} parent=1 // pred_fallthru
      _
    %v76 = vld [vmem:[%s0] sm:$0xff]
    %v77 = vld [vmem:[%s0 + $0x8] sm:$0xff]
    %v78 = vld [vmem:[#allocation2] sm:$0x1]
    %v79 = vld [vmem:[%s2] sm:$0x1]
    %vm80 = vcmask 261120
    %v81 = vsel %vm80, %v76, 0.0
    %82 = vadd.xlane.f32.xlu0 %v81
    %v83 = vpop.xlane.xlu0 %82
    %v84 = vsel %vm80, %v77, 0.0
    %85 = vadd.xlane.f32.xlu0 %v84
    %v86 = vpop.xlane.xlu0 %85
    %v87 = vrcp.pop 32.0
    %v88 = vmul.f32 32.0, %v87
    %v89 = vsub.f32 1.0, %v88
    %v90 = vmul.f32 %v87, %v89
    %v91 = vadd.f32 %v87, %v90
    %vm92 = vweird.f32 %v87
    %v93 = vsel %vm92, %v87, %v91
    %v94 = vmul.f32 %v83, %v93
    %v95 = vmul.f32 %v86, %v93
    %v96 = vsub.f32 %v76, %v94
    %v97 = vsub.f32 %v77, %v95
    %v98 = vmul.f32 %v96, %v96
    %v99 = vmul.f32 %v97, %v97
    %v100 = vsel %vm80, %v98, 0.0
    %101 = vadd.xlane.f32.xlu0 %v100
    %v102 = vpop.xlane.xlu0 %101
    %v103 = vsel %vm80, %v99, 0.0
    %104 = vadd.xlane.f32.xlu0 %v103
    %v105 = vpop.xlane.xlu0 %104
    %v106 = vmul.f32 %v102, %v93
    %v107 = vmul.f32 %v105, %v93
    %v108 = vadd.f32 %v106, 1e-05
    %v109 = vadd.f32 %v107, 1e-05
    %v110 = vrsqrt.pop %v108
    %v111 = vmul.f32 %v110, %v108
    %v112 = vmul.f32 %v111, %v110
    %v113 = vmul.f32 0.5, %v112
    %v114 = vsub.f32 1.5, %v113
    %v115 = vmul.f32 %v110, %v114
    %vm116 = vweird.f32 %v108
    %vm117 = vweird.f32 %v110
    %vm118 = vmor %vm116, %vm117
    %v119 = vsel %vm118, %v110, %v115
    %v120 = vrsqrt.pop %v109
    %v121 = vmul.f32 %v120, %v109
    %v122 = vmul.f32 %v121, %v120
    %v123 = vmul.f32 0.5, %v122
    %v124 = vsub.f32 1.5, %v123
    %v125 = vmul.f32 %v120, %v124
    %vm126 = vweird.f32 %v109
    %vm127 = vweird.f32 %v120
    %vm128 = vmor %vm126, %vm127
    %v129 = vsel %vm128, %v120, %v125
    %v130 = vmul.f32 %v96, %v119
    %v131 = vmul.f32 %v97, %v129
    %v133 = vperm.slane %v78, 0
    %v135 = vmul.f32 %v130, %v133
    %v136 = vmul.f32 %v131, %v133
    %v138 = vperm.slane %v79, 0
    %v140 = vadd.f32 %v135, %v138
    %v141 = vadd.f32 %v136, %v138
    %v142 = vpack.c.bf16 %v141, %v140
    %v143 = vld [vmem:[%s3] sm:$0xf]
    %v144 = vld [vmem:[%s3 + $0x4] sm:$0xf]
    %v145 = vld [vmem:[%s3 + $0x8] sm:$0xf]
    %v146 = vld [vmem:[%s3 + $0xc] sm:$0xf]
    %v147 = vld [vmem:[%s4] sm:$0x1]
    %v149 = vperm.slane %v147, 0
    %v155 = vunpack.c.l.b16 %v143
    %v156 = vunpack.c.l.b16 %v144
    %v157 = vunpack.c.l.b16 %v145
    %v158 = vunpack.c.l.b16 %v146
    %v159 = vpack.c.b16 %v156, %v155
    %v160 = vpack.c.b16 %v158, %v157
    %v164 = vsel %vm80, %v142, 0
    %166 = vmatpush.bf16.msra.mxu0 0
    %167 = vmatpush.bf16.msra.mxu0 0
    %168 = vmatpush.bf16.msra.mxu0 0
    %169 = vmatpush.bf16.msra.mxu0 0
    %170 = vmatpush.bf16.msra.mxu0 0
    %171 = vmatpush.bf16.msra.mxu0 0
    %172 = vmatpush.bf16.msra.mxu0 %v160
    %173 = vmatpush.bf16.msra.mxu0 %v159
    %174 = vmatmul.bf16.gmra.mxu0 %v164
    %v175 = vpop.f32.mrf.mxu0
    %v176 = vadd.f32 %v149, %v175
    %v177 = vpop.f32.mrf.mxu0
    %v178 = vadd.f32 %v149, %v177
    %179 = vdwg.mxu0
    %v180 = vpack.c.bf16 %v176, %v176
    %v181 = vpack.c.bf16 %v178, %v178
    %v183 = vunpack.c.l.b16 %v180
    %v184 = vpack.c.b16 %v183, %v183
    %185 = vrot.lane.b32.xlu0 %v184, 96
    %v186 = vpop.permute.xlu0 %185
    %vm187 = vcmask 64512
    %v189 = vsel %vm187, %v180, 0
    %v192 = vsel %vm187, %v186, 0
    %194 = vmatpush.bf16.xpose.msra.mxu0 0
    %195 = vmatpush.bf16.xpose.msra.mxu0 0
    %196 = vmatpush.bf16.xpose.msra.mxu0 0
    %197 = vmatpush.bf16.xpose.msra.mxu0 0
    %198 = vmatpush.bf16.xpose.msra.mxu0 0
    %199 = vmatpush.bf16.xpose.msra.mxu0 0
    %200 = vmatpush.bf16.xpose.msra.mxu0 0
    %201 = vmatpush.bf16.xpose.msra.mxu0 %v192
    %202 = vmatmul.bf16.gmra.mxu0 %v189
    %v203 = vpop.f32.mrf.mxu0
    %v204 = vadd.f32 0.0, %v203
    %v205 = vpop.f32.mrf.mxu0
    %206 = vdwg.mxu0
    %v207 = vsel %vm187, %v204, -inf
    %208 = vmax.xlane.f32.xlu0 %v207
    %v209 = vpop.xlane.xlu0 %208
    %v210 = vsub.f32 %v204, %v209
    %v211 = vmul.f32 %v210, 1.442695
    %v212 = vpow.pop %v211
    %v213 = vsel %vm187, %v212, 0.0
    %214 = vadd.xlane.f32.xlu0 %v213
    %v215 = vpop.xlane.xlu0 %214
    %v216 = vrcp.pop %v215
    %v217 = vmul.f32 %v212, %v216
    %v218 = vpack.c.bf16 %v217, %v217
    %219 = vrot.lane.b32.xlu0 %v184, 64
    %v220 = vpop.permute.xlu0 %219
    %v222 = vsel %vm187, %v218, 0
    %vm224 = vcmask 1043456
    %v226 = vsel %vm224, %v220, 0
    %228 = vmatpush.bf16.msra.mxu0 0
    %229 = vmatpush.bf16.msra.mxu0 0
    %230 = vmatpush.bf16.msra.mxu0 0
    %231 = vmatpush.bf16.msra.mxu0 0
    %232 = vmatpush.bf16.msra.mxu0 0
    %233 = vmatpush.bf16.msra.mxu0 0
    %234 = vmatpush.bf16.msra.mxu0 0
    %235 = vmatpush.bf16.msra.mxu0 %v226
    %236 = vmatmul.bf16.gmra.mxu0 %v222
    %v237 = vpop.f32.mrf.mxu0
    %v238 = vadd.f32 0.0, %v237
    %v239 = vpop.f32.mrf.mxu0
    %240 = vdwg.mxu0
    %241 = vrot.lane.b32.xlu0 %v184, 120
    %v242 = vpop.permute.xlu0 %241
    %243 = vrot.lane.b32.xlu0 %v184, 88
    %v244 = vpop.permute.xlu0 %243
    %v246 = vsel %vm187, %v242, 0
    %v249 = vsel %vm187, %v244, 0
    %251 = vmatpush.bf16.xpose.msra.mxu0 0
    %252 = vmatpush.bf16.xpose.msra.mxu0 0
    %253 = vmatpush.bf16.xpose.msra.mxu0 0
    %254 = vmatpush.bf16.xpose.msra.mxu0 0
    %255 = vmatpush.bf16.xpose.msra.mxu0 0
    %256 = vmatpush.bf16.xpose.msra.mxu0 0
    %257 = vmatpush.bf16.xpose.msra.mxu0 0
    %258 = vmatpush.bf16.xpose.msra.mxu0 %v249
    %259 = vmatmul.bf16.gmra.mxu0 %v246
    %v260 = vpop.f32.mrf.mxu0
    %v261 = vadd.f32 0.0, %v260
    %v262 = vpop.f32.mrf.mxu0
    %263 = vdwg.mxu0
    %v264 = vsel %vm187, %v261, -inf
    %265 = vmax.xlane.f32.xlu0 %v264
    %v266 = vpop.xlane.xlu0 %265
    %v267 = vsub.f32 %v261, %v266
    %v268 = vmul.f32 %v267, 1.442695
    %v269 = vpow.pop %v268
    %v270 = vsel %vm187, %v269, 0.0
    %271 = vadd.xlane.f32.xlu0 %v270
    %v272 = vpop.xlane.xlu0 %271
    %v273 = vrcp.pop %v272
    %v274 = vmul.f32 %v269, %v273
    %v275 = vpack.c.bf16 %v274, %v274
    %276 = vrot.lane.b32.xlu0 %v184, 56
    %v277 = vpop.permute.xlu0 %276
    %v279 = vsel %vm187, %v275, 0
    %v282 = vsel %vm224, %v277, 0
    %284 = vmatpush.bf16.msra.mxu0 0
    %285 = vmatpush.bf16.msra.mxu0 0
    %286 = vmatpush.bf16.msra.mxu0 0
    %287 = vmatpush.bf16.msra.mxu0 0
    %288 = vmatpush.bf16.msra.mxu0 0
    %289 = vmatpush.bf16.msra.mxu0 0
    %290 = vmatpush.bf16.msra.mxu0 0
    %291 = vmatpush.bf16.msra.mxu0 %v282
    %292 = vmatmul.bf16.gmra.mxu0 %v279
    %v293 = vpop.f32.mrf.mxu0
    %v294 = vadd.f32 0.0, %v293
    %v295 = vpop.f32.mrf.mxu0
    %296 = vdwg.mxu0
    %297 = vrot.lane.b32.xlu0 %v184, 112
    %v298 = vpop.permute.xlu0 %297
    %299 = vrot.lane.b32.xlu0 %v184, 80
    %v300 = vpop.permute.xlu0 %299
    %v302 = vsel %vm187, %v298, 0
    %v305 = vsel %vm187, %v300, 0
    %307 = vmatpush.bf16.xpose.msra.mxu0 0
    %308 = vmatpush.bf16.xpose.msra.mxu0 0
    %309 = vmatpush.bf16.xpose.msra.mxu0 0
    %310 = vmatpush.bf16.xpose.msra.mxu0 0
    %311 = vmatpush.bf16.xpose.msra.mxu0 0
    %312 = vmatpush.bf16.xpose.msra.mxu0 0
    %313 = vmatpush.bf16.xpose.msra.mxu0 0
    %314 = vmatpush.bf16.xpose.msra.mxu0 %v305
    %315 = vmatmul.bf16.gmra.mxu0 %v302
    %v316 = vpop.f32.mrf.mxu0
    %v317 = vadd.f32 0.0, %v316
    %v318 = vpop.f32.mrf.mxu0
    %319 = vdwg.mxu0
    %v320 = vsel %vm187, %v317, -inf
    %321 = vmax.xlane.f32.xlu0 %v320
    %v322 = vpop.xlane.xlu0 %321
    %v323 = vsub.f32 %v317, %v322
    %v324 = vmul.f32 %v323, 1.442695
    %v325 = vpow.pop %v324
    %v326 = vsel %vm187, %v325, 0.0
    %327 = vadd.xlane.f32.xlu0 %v326
    %v328 = vpop.xlane.xlu0 %327
    %v329 = vrcp.pop %v328
    %v330 = vmul.f32 %v325, %v329
    %v331 = vpack.c.bf16 %v330, %v330
    %332 = vrot.lane.b32.xlu0 %v184, 48
    %v333 = vpop.permute.xlu0 %332
    %v335 = vsel %vm187, %v331, 0
    %v338 = vsel %vm224, %v333, 0
    %340 = vmatpush.bf16.msra.mxu0 0
    %341 = vmatpush.bf16.msra.mxu0 0
    %342 = vmatpush.bf16.msra.mxu0 0
    %343 = vmatpush.bf16.msra.mxu0 0
    %344 = vmatpush.bf16.msra.mxu0 0
    %345 = vmatpush.bf16.msra.mxu0 0
    %346 = vmatpush.bf16.msra.mxu0 0
    %347 = vmatpush.bf16.msra.mxu0 %v338
    %348 = vmatmul.bf16.gmra.mxu0 %v335
    %v349 = vpop.f32.mrf.mxu0
    %v350 = vadd.f32 0.0, %v349
    %v351 = vpop.f32.mrf.mxu0
    %352 = vdwg.mxu0
    %353 = vrot.lane.b32.xlu0 %v184, 104
    %v354 = vpop.permute.xlu0 %353
    %355 = vrot.lane.b32.xlu0 %v184, 72
    %v356 = vpop.permute.xlu0 %355
    %v358 = vsel %vm187, %v354, 0
    %v361 = vsel %vm187, %v356, 0
    %363 = vmatpush.bf16.xpose.msra.mxu0 0
    %364 = vmatpush.bf16.xpose.msra.mxu0 0
    %365 = vmatpush.bf16.xpose.msra.mxu0 0
    %366 = vmatpush.bf16.xpose.msra.mxu0 0
    %367 = vmatpush.bf16.xpose.msra.mxu0 0
    %368 = vmatpush.bf16.xpose.msra.mxu0 0
    %369 = vmatpush.bf16.xpose.msra.mxu0 0
    %370 = vmatpush.bf16.xpose.msra.mxu0 %v361
    %371 = vmatmul.bf16.gmra.mxu0 %v358
    %v372 = vpop.f32.mrf.mxu0
    %v373 = vadd.f32 0.0, %v372
    %v374 = vpop.f32.mrf.mxu0
    %375 = vdwg.mxu0
    %v376 = vsel %vm187, %v373, -inf
    %377 = vmax.xlane.f32.xlu0 %v376
    %v378 = vpop.xlane.xlu0 %377
    %v379 = vsub.f32 %v373, %v378
    %v380 = vmul.f32 %v379, 1.442695
    %v381 = vpow.pop %v380
    %v382 = vsel %vm187, %v381, 0.0
    %383 = vadd.xlane.f32.xlu0 %v382
    %v384 = vpop.xlane.xlu0 %383
    %v385 = vrcp.pop %v384
    %v386 = vmul.f32 %v381, %v385
    %v387 = vpack.c.bf16 %v386, %v386
    %388 = vrot.lane.b32.xlu0 %v184, 40
    %v389 = vpop.permute.xlu0 %388
    %v391 = vsel %vm187, %v387, 0
    %v394 = vsel %vm224, %v389, 0
    %396 = vmatpush.bf16.msra.mxu0 0
    %397 = vmatpush.bf16.msra.mxu0 0
    %398 = vmatpush.bf16.msra.mxu0 0
    %399 = vmatpush.bf16.msra.mxu0 0
    %400 = vmatpush.bf16.msra.mxu0 0
    %401 = vmatpush.bf16.msra.mxu0 0
    %402 = vmatpush.bf16.msra.mxu0 0
    %403 = vmatpush.bf16.msra.mxu0 %v394
    %404 = vmatmul.bf16.gmra.mxu0 %v391
    %v405 = vpop.f32.mrf.mxu0
    %v406 = vadd.f32 0.0, %v405
    %v407 = vpop.f32.mrf.mxu0
    %408 = vdwg.mxu0
    %410 = vrot.lane.b32.xlu0 %v294, 8
    %v411 = vpop.permute.xlu0 %410
    %414 = vrot.lane.b32.xlu0 %v350, 16
    %v415 = vpop.permute.xlu0 %414
    %418 = vrot.lane.b32.xlu0 %v406, 24
    %v419 = vpop.permute.xlu0 %418
    %v421 = vsel %vm187, %v238, %v411
    %vm422 = vcmask 130048
    %v423 = vsel %vm422, %v421, %v415
    %vm424 = vcmask 195584
    %v425 = vsel %vm424, %v423, %v419
    %v427 = vunpack.c.l.b16 %v181
    %v428 = vpack.c.b16 %v427, %v427
    %429 = vrot.lane.b32.xlu0 %v428, 96
    %v430 = vpop.permute.xlu0 %429
    %v432 = vsel %vm187, %v181, 0
    %v435 = vsel %vm187, %v430, 0
    %437 = vmatpush.bf16.xpose.msra.mxu0 0
    %438 = vmatpush.bf16.xpose.msra.mxu0 0
    %439 = vmatpush.bf16.xpose.msra.mxu0 0
    %440 = vmatpush.bf16.xpose.msra.mxu0 0
    %441 = vmatpush.bf16.xpose.msra.mxu0 0
    %442 = vmatpush.bf16.xpose.msra.mxu0 0
    %443 = vmatpush.bf16.xpose.msra.mxu0 0
    %444 = vmatpush.bf16.xpose.msra.mxu0 %v435
    %445 = vmatmul.bf16.gmra.mxu0 %v432
    %v446 = vpop.f32.mrf.mxu0
    %v447 = vadd.f32 0.0, %v446
    %v448 = vpop.f32.mrf.mxu0
    %449 = vdwg.mxu0
    %v450 = vsel %vm187, %v447, -inf
    %451 = vmax.xlane.f32.xlu0 %v450
    %v452 = vpop.xlane.xlu0 %451
    %v453 = vsub.f32 %v447, %v452
    %v454 = vmul.f32 %v453, 1.442695
    %v455 = vpow.pop %v454
    %v456 = vsel %vm187, %v455, 0.0
    %457 = vadd.xlane.f32.xlu0 %v456
    %v458 = vpop.xlane.xlu0 %457
    %v459 = vrcp.pop %v458
    %v460 = vmul.f32 %v455, %v459
    %v461 = vpack.c.bf16 %v460, %v460
    %462 = vrot.lane.b32.xlu0 %v428, 64
    %v463 = vpop.permute.xlu0 %462
    %v465 = vsel %vm187, %v461, 0
    %v468 = vsel %vm224, %v463, 0
    %470 = vmatpush.bf16.msra.mxu0 0
    %471 = vmatpush.bf16.msra.mxu0 0
    %472 = vmatpush.bf16.msra.mxu0 0
    %473 = vmatpush.bf16.msra.mxu0 0
    %474 = vmatpush.bf16.msra.mxu0 0
    %475 = vmatpush.bf16.msra.mxu0 0
    %476 = vmatpush.bf16.msra.mxu0 0
    %477 = vmatpush.bf16.msra.mxu0 %v468
    %478 = vmatmul.bf16.gmra.mxu0 %v465
    %v479 = vpop.f32.mrf.mxu0
    %v480 = vadd.f32 0.0, %v479
    %v481 = vpop.f32.mrf.mxu0
    %482 = vdwg.mxu0
    %483 = vrot.lane.b32.xlu0 %v428, 120
    %v484 = vpop.permute.xlu0 %483
    %485 = vrot.lane.b32.xlu0 %v428, 88
    %v486 = vpop.permute.xlu0 %485
    %v488 = vsel %vm187, %v484, 0
    %v491 = vsel %vm187, %v486, 0
    %493 = vmatpush.bf16.xpose.msra.mxu0 0
    %494 = vmatpush.bf16.xpose.msra.mxu0 0
    %495 = vmatpush.bf16.xpose.msra.mxu0 0
    %496 = vmatpush.bf16.xpose.msra.mxu0 0
    %497 = vmatpush.bf16.xpose.msra.mxu0 0
    %498 = vmatpush.bf16.xpose.msra.mxu0 0
    %499 = vmatpush.bf16.xpose.msra.mxu0 0
    %500 = vmatpush.bf16.xpose.msra.mxu0 %v491
    %501 = vmatmul.bf16.gmra.mxu0 %v488
    %v502 = vpop.f32.mrf.mxu0
    %v503 = vadd.f32 0.0, %v502
    %v504 = vpop.f32.mrf.mxu0
    %505 = vdwg.mxu0
    %v506 = vsel %vm187, %v503, -inf
    %507 = vmax.xlane.f32.xlu0 %v506
    %v508 = vpop.xlane.xlu0 %507
    %v509 = vsub.f32 %v503, %v508
    %v510 = vmul.f32 %v509, 1.442695
    %v511 = vpow.pop %v510
    %v512 = vsel %vm187, %v511, 0.0
    %513 = vadd.xlane.f32.xlu0 %v512
    %v514 = vpop.xlane.xlu0 %513
    %v515 = vrcp.pop %v514
    %v516 = vmul.f32 %v511, %v515
    %v517 = vpack.c.bf16 %v516, %v516
    %518 = vrot.lane.b32.xlu0 %v428, 56
    %v519 = vpop.permute.xlu0 %518
    %v521 = vsel %vm187, %v517, 0
    %v524 = vsel %vm224, %v519, 0
    %526 = vmatpush.bf16.msra.mxu0 0
    %527 = vmatpush.bf16.msra.mxu0 0
    %528 = vmatpush.bf16.msra.mxu0 0
    %529 = vmatpush.bf16.msra.mxu0 0
    %530 = vmatpush.bf16.msra.mxu0 0
    %531 = vmatpush.bf16.msra.mxu0 0
    %532 = vmatpush.bf16.msra.mxu0 0
    %533 = vmatpush.bf16.msra.mxu0 %v524
    %534 = vmatmul.bf16.gmra.mxu0 %v521
    %v535 = vpop.f32.mrf.mxu0
    %v536 = vadd.f32 0.0, %v535
    %v537 = vpop.f32.mrf.mxu0
    %538 = vdwg.mxu0
    %539 = vrot.lane.b32.xlu0 %v428, 112
    %v540 = vpop.permute.xlu0 %539
    %541 = vrot.lane.b32.xlu0 %v428, 80
    %v542 = vpop.permute.xlu0 %541
    %v544 = vsel %vm187, %v540, 0
    %v547 = vsel %vm187, %v542, 0
    %549 = vmatpush.bf16.xpose.msra.mxu0 0
    %550 = vmatpush.bf16.xpose.msra.mxu0 0
    %551 = vmatpush.bf16.xpose.msra.mxu0 0
    %552 = vmatpush.bf16.xpose.msra.mxu0 0
    %553 = vmatpush.bf16.xpose.msra.mxu0 0
    %554 = vmatpush.bf16.xpose.msra.mxu0 0
    %555 = vmatpush.bf16.xpose.msra.mxu0 0
    %556 = vmatpush.bf16.xpose.msra.mxu0 %v547
    %557 = vmatmul.bf16.gmra.mxu0 %v544
    %v558 = vpop.f32.mrf.mxu0
    %v559 = vadd.f32 0.0, %v558
    %v560 = vpop.f32.mrf.mxu0
    %561 = vdwg.mxu0
    %v562 = vsel %vm187, %v559, -inf
    %563 = vmax.xlane.f32.xlu0 %v562
    %v564 = vpop.xlane.xlu0 %563
    %v565 = vsub.f32 %v559, %v564
    %v566 = vmul.f32 %v565, 1.442695
    %v567 = vpow.pop %v566
    %v568 = vsel %vm187, %v567, 0.0
    %569 = vadd.xlane.f32.xlu0 %v568
    %v570 = vpop.xlane.xlu0 %569
    %v571 = vrcp.pop %v570
    %v572 = vmul.f32 %v567, %v571
    %v573 = vpack.c.bf16 %v572, %v572
    %574 = vrot.lane.b32.xlu0 %v428, 48
    %v575 = vpop.permute.xlu0 %574
    %v577 = vsel %vm187, %v573, 0
    %v580 = vsel %vm224, %v575, 0
    %582 = vmatpush.bf16.msra.mxu0 0
    %583 = vmatpush.bf16.msra.mxu0 0
    %584 = vmatpush.bf16.msra.mxu0 0
    %585 = vmatpush.bf16.msra.mxu0 0
    %586 = vmatpush.bf16.msra.mxu0 0
    %587 = vmatpush.bf16.msra.mxu0 0
    %588 = vmatpush.bf16.msra.mxu0 0
    %589 = vmatpush.bf16.msra.mxu0 %v580
    %590 = vmatmul.bf16.gmra.mxu0 %v577
    %v591 = vpop.f32.mrf.mxu0
    %v592 = vadd.f32 0.0, %v591
    %v593 = vpop.f32.mrf.mxu0
    %594 = vdwg.mxu0
    %595 = vrot.lane.b32.xlu0 %v428, 104
    %v596 = vpop.permute.xlu0 %595
    %597 = vrot.lane.b32.xlu0 %v428, 72
    %v598 = vpop.permute.xlu0 %597
    %v600 = vsel %vm187, %v596, 0
    %v603 = vsel %vm187, %v598, 0
    %605 = vmatpush.bf16.xpose.msra.mxu0 0
    %606 = vmatpush.bf16.xpose.msra.mxu0 0
    %607 = vmatpush.bf16.xpose.msra.mxu0 0
    %608 = vmatpush.bf16.xpose.msra.mxu0 0
    %609 = vmatpush.bf16.xpose.msra.mxu0 0
    %610 = vmatpush.bf16.xpose.msra.mxu0 0
    %611 = vmatpush.bf16.xpose.msra.mxu0 0
    %612 = vmatpush.bf16.xpose.msra.mxu0 %v603
    %613 = vmatmul.bf16.gmra.mxu0 %v600
    %v614 = vpop.f32.mrf.mxu0
    %v615 = vadd.f32 0.0, %v614
    %v616 = vpop.f32.mrf.mxu0
    %617 = vdwg.mxu0
    %v618 = vsel %vm187, %v615, -inf
    %619 = vmax.xlane.f32.xlu0 %v618
    %v620 = vpop.xlane.xlu0 %619
    %v621 = vsub.f32 %v615, %v620
    %v622 = vmul.f32 %v621, 1.442695
    %v623 = vpow.pop %v622
    %v624 = vsel %vm187, %v623, 0.0
    %625 = vadd.xlane.f32.xlu0 %v624
    %v626 = vpop.xlane.xlu0 %625
    %v627 = vrcp.pop %v626
    %v628 = vmul.f32 %v623, %v627
    %v629 = vpack.c.bf16 %v628, %v628
    %630 = vrot.lane.b32.xlu0 %v428, 40
    %v631 = vpop.permute.xlu0 %630
    %v633 = vsel %vm187, %v629, 0
    %v636 = vsel %vm224, %v631, 0
    %638 = vmatpush.bf16.msra.mxu0 0
    %639 = vmatpush.bf16.msra.mxu0 0
    %640 = vmatpush.bf16.msra.mxu0 0
    %641 = vmatpush.bf16.msra.mxu0 0
    %642 = vmatpush.bf16.msra.mxu0 0
    %643 = vmatpush.bf16.msra.mxu0 0
    %644 = vmatpush.bf16.msra.mxu0 0
    %645 = vmatpush.bf16.msra.mxu0 %v636
    %646 = vmatmul.bf16.gmra.mxu0 %v633
    %v647 = vpop.f32.mrf.mxu0
    %v648 = vadd.f32 0.0, %v647
    %v649 = vpop.f32.mrf.mxu0
    %650 = vdwg.mxu0
    %652 = vrot.lane.b32.xlu0 %v536, 8
    %v653 = vpop.permute.xlu0 %652
    %656 = vrot.lane.b32.xlu0 %v592, 16
    %v657 = vpop.permute.xlu0 %656
    %660 = vrot.lane.b32.xlu0 %v648, 24
    %v661 = vpop.permute.xlu0 %660
    %v663 = vsel %vm187, %v480, %v653
    %v664 = vsel %vm422, %v663, %v657
    %v665 = vsel %vm424, %v664, %v661
    %v666 = vpack.c.bf16 %v665, %v425
    %v667 = vld [vmem:[%s5] sm:$0xf]
    %v668 = vld [vmem:[%s5 + $0x4] sm:$0xf]
    %v669 = vld [vmem:[%s5 + $0x8] sm:$0xf]
    %v670 = vld [vmem:[%s5 + $0xc] sm:$0xf]
    %v671 = vld [vmem:[%s6] sm:$0x1]
    %v673 = vperm.slane %v671, 0
    %v679 = vunpack.c.l.b16 %v667
    %v680 = vunpack.c.l.b16 %v668
    %v681 = vunpack.c.l.b16 %v669
    %v682 = vunpack.c.l.b16 %v670
    %v683 = vpack.c.b16 %v680, %v679
    %v684 = vpack.c.b16 %v682, %v681
    %v688 = vsel %vm80, %v666, 0
    %690 = vmatpush.bf16.msra.mxu0 0
    %691 = vmatpush.bf16.msra.mxu0 0
    %692 = vmatpush.bf16.msra.mxu0 0
    %693 = vmatpush.bf16.msra.mxu0 0
    %694 = vmatpush.bf16.msra.mxu0 0
    %695 = vmatpush.bf16.msra.mxu0 0
    %696 = vmatpush.bf16.msra.mxu0 %v684
    %697 = vmatpush.bf16.msra.mxu0 %v683
    %698 = vmatmul.bf16.gmra.mxu0 %v688
    %v699 = vpop.f32.mrf.mxu0
    %v700 = vadd.f32 %v673, %v699
    %v701 = vpop.f32.mrf.mxu0
    %v702 = vadd.f32 %v673, %v701
    %703 = vdwg.mxu0
    %v704 = vadd.f32 %v76, %v700
    %v705 = vadd.f32 %v77, %v702
    %v706 = vld [vmem:[%s7] sm:$0x1]
    %v707 = vld [vmem:[%s8] sm:$0x1]
    %v708 = vsel %vm80, %v704, 0.0
    %709 = vadd.xlane.f32.xlu0 %v708
    %v710 = vpop.xlane.xlu0 %709
    %v711 = vsel %vm80, %v705, 0.0
    %712 = vadd.xlane.f32.xlu0 %v711
    %v713 = vpop.xlane.xlu0 %712
    %v714 = vmul.f32 %v710, %v93
    %v715 = vmul.f32 %v713, %v93
    %v716 = vsub.f32 %v704, %v714
    %v717 = vsub.f32 %v705, %v715
    %v718 = vmul.f32 %v716, %v716
    %v719 = vmul.f32 %v717, %v717
    %v720 = vsel %vm80, %v718, 0.0
    %721 = vadd.xlane.f32.xlu0 %v720
    %v722 = vpop.xlane.xlu0 %721
    %v723 = vsel %vm80, %v719, 0.0
    %724 = vadd.xlane.f32.xlu0 %v723
    %v725 = vpop.xlane.xlu0 %724
    %v726 = vmul.f32 %v722, %v93
    %v727 = vmul.f32 %v725, %v93
    %v728 = vadd.f32 %v726, 1e-05
    %v729 = vadd.f32 %v727, 1e-05
    %v730 = vrsqrt.pop %v728
    %v731 = vmul.f32 %v730, %v728
    %v732 = vmul.f32 %v731, %v730
    %v733 = vmul.f32 0.5, %v732
    %v734 = vsub.f32 1.5, %v733
    %v735 = vmul.f32 %v730, %v734
    %vm736 = vweird.f32 %v728
    %vm737 = vweird.f32 %v730
    %vm738 = vmor %vm736, %vm737
    %v739 = vsel %vm738, %v730, %v735
    %v740 = vrsqrt.pop %v729
    %v741 = vmul.f32 %v740, %v729
    %v742 = vmul.f32 %v741, %v740
    %v743 = vmul.f32 0.5, %v742
    %v744 = vsub.f32 1.5, %v743
    %v745 = vmul.f32 %v740, %v744
    %vm746 = vweird.f32 %v729
    %vm747 = vweird.f32 %v740
    %vm748 = vmor %vm746, %vm747
    %v749 = vsel %vm748, %v740, %v745
    %v750 = vmul.f32 %v716, %v739
    %v751 = vmul.f32 %v717, %v749
    %v753 = vperm.slane %v706, 0
    %v755 = vmul.f32 %v750, %v753
    %v756 = vmul.f32 %v751, %v753
    %v758 = vperm.slane %v707, 0
    %v760 = vadd.f32 %v755, %v758
    %v761 = vadd.f32 %v756, %v758
    %v762 = vpack.c.bf16 %v761, %v760
    %v763 = vld [vmem:[#allocation5] sm:$0xf]
    %v764 = vld [vmem:[#allocation5 + $0x4] sm:$0xf]
    %v765 = vld [vmem:[#allocation5 + $0x8] sm:$0xf]
    %v766 = vld [vmem:[#allocation5 + $0xc] sm:$0xf]
    %v767 = vld [vmem:[%s10] sm:$0x1]
    %v769 = vperm.slane %v767, 0
    %v775 = vunpack.c.l.b16 %v763
    %v776 = vunpack.c.l.b16 %v764
    %v777 = vunpack.c.l.b16 %v765
    %v778 = vunpack.c.l.b16 %v766
    %v779 = vpack.c.b16 %v776, %v775
    %v780 = vpack.c.b16 %v778, %v777
    %v784 = vsel %vm80, %v762, 0
    %786 = vmatpush.bf16.msra.mxu0 0
    %787 = vmatpush.bf16.msra.mxu0 0
    %788 = vmatpush.bf16.msra.mxu0 0
    %789 = vmatpush.bf16.msra.mxu0 0
    %790 = vmatpush.bf16.msra.mxu0 0
    %791 = vmatpush.bf16.msra.mxu0 0
    %792 = vmatpush.bf16.msra.mxu0 %v780
    %793 = vmatpush.bf16.msra.mxu0 %v779
    %794 = vmatmul.bf16.gmra.mxu0 %v784
    %v795 = vpop.f32.mrf.mxu0
    %v796 = vadd.f32 %v769, %v795
    %v797 = vpop.f32.mrf.mxu0
    %v798 = vadd.f32 %v769, %v797
    %799 = vdwg.mxu0
    %v800 = vmul.f32 %v796, 0.5
    %v801 = vmul.f32 %v798, 0.5
    %v802 = vmul.f32 %v796, 0.70710677
    %v803 = vmul.f32 %v798, 0.70710677
    %v804 = vmul.f32 %v802, %v802
    %v805 = vmin.f32 16.0, %v804
    %v806 = vmul.f32 %v805, 2.1237322e-06
    %v807 = vadd.f32 %v806, 0.00028619796
    %v808 = vmul.f32 %v805, %v807
    %v809 = vadd.f32 %v808, 0.0036580483
    %v810 = vmul.f32 %v805, %v809
    %v811 = vadd.f32 %v810, 0.05243302
    %v812 = vmul.f32 %v805, %v811
    %v813 = vadd.f32 %v812, 0.18741608
    %v814 = vmul.f32 %v805, %v813
    %v815 = vadd.f32 %v814, 1.1283791
    %v816 = vmul.f32 %v802, %v815
    %v817 = vmul.f32 %v805, 3.8918573e-05
    %v818 = vadd.f32 %v817, 0.001143296
    %v819 = vmul.f32 %v805, %v818
    %v820 = vadd.f32 %v819, 0.014752088
    %v821 = vmul.f32 %v805, %v820
    %v822 = vadd.f32 %v821, 0.112945676
    %v823 = vmul.f32 %v805, %v822
    %v824 = vadd.f32 %v823, 0.4994258
    %v825 = vmul.f32 %v805, %v824
    %v826 = vadd.f32 %v825, 1.0
    %v827 = vrcp.pop %v826
    %v828 = vmul.f32 %v826, %v827
    %v829 = vsub.f32 1.0, %v828
    %v830 = vmul.f32 %v827, %v829
    %v831 = vadd.f32 %v827, %v830
    %vm832 = vweird.f32 %v826
    %vm833 = vweird.f32 %v827
    %vm834 = vmor %vm832, %vm833
    %v835 = vsel %vm834, %v827, %v831
    %v836 = vand.u32 2147483647, %v826
    %vm837 = vcmp.eq.f32.partialorder %v836, 8.507059e+37
    %v838 = vand.u32 %v826, 2147483648
    %v839 = vor.u32 1.1754944e-38, %v838
    %v840 = vsel %vm837, %v839, %v835
    %v841 = vmul.f32 %v816, %v840
    %v842 = vmin.f32 %v841, 1.0
    %v843 = vmax.f32 %v842, -1.0
    %v844 = vmul.f32 %v803, %v803
    %v845 = vmin.f32 16.0, %v844
    %v846 = vmul.f32 %v845, 2.1237322e-06
    %v847 = vadd.f32 %v846, 0.00028619796
    %v848 = vmul.f32 %v845, %v847
    %v849 = vadd.f32 %v848, 0.0036580483
    %v850 = vmul.f32 %v845, %v849
    %v851 = vadd.f32 %v850, 0.05243302
    %v852 = vmul.f32 %v845, %v851
    %v853 = vadd.f32 %v852, 0.18741608
    %v854 = vmul.f32 %v845, %v853
    %v855 = vadd.f32 %v854, 1.1283791
    %v856 = vmul.f32 %v803, %v855
    %v857 = vmul.f32 %v845, 3.8918573e-05
    %v858 = vadd.f32 %v857, 0.001143296
    %v859 = vmul.f32 %v845, %v858
    %v860 = vadd.f32 %v859, 0.014752088
    %v861 = vmul.f32 %v845, %v860
    %v862 = vadd.f32 %v861, 0.112945676
    %v863 = vmul.f32 %v845, %v862
    %v864 = vadd.f32 %v863, 0.4994258
    %v865 = vmul.f32 %v845, %v864
    %v866 = vadd.f32 %v865, 1.0
    %v867 = vrcp.pop %v866
    %v868 = vmul.f32 %v866, %v867
    %v869 = vsub.f32 1.0, %v868
    %v870 = vmul.f32 %v867, %v869
    %v871 = vadd.f32 %v867, %v870
    %vm872 = vweird.f32 %v866
    %vm873 = vweird.f32 %v867
    %vm874 = vmor %vm872, %vm873
    %v875 = vsel %vm874, %v867, %v871
    %v876 = vand.u32 2147483647, %v866
    %vm877 = vcmp.eq.f32.partialorder %v876, 8.507059e+37
    %v878 = vand.u32 %v866, 2147483648
    %v879 = vor.u32 1.1754944e-38, %v878
    %v880 = vsel %vm877, %v879, %v875
    %v881 = vmul.f32 %v856, %v880
    %v882 = vmin.f32 %v881, 1.0
    %v883 = vmax.f32 %v882, -1.0
    %v884 = vadd.f32 %v843, 1.0
    %v885 = vadd.f32 %v883, 1.0
    %v886 = vmul.f32 %v800, %v884
    %v887 = vmul.f32 %v801, %v885
    %v888 = vpack.c.bf16 %v887, %v886
    %v889 = vld [vmem:[%s11] sm:$0xf]
    %v890 = vld [vmem:[%s11 + $0x4] sm:$0xf]
    %v891 = vld [vmem:[%s11 + $0x8] sm:$0xf]
    %v892 = vld [vmem:[%s11 + $0xc] sm:$0xf]
    %v893 = vld [vmem:[%s11 + $0x10] sm:$0xf]
    %v894 = vld [vmem:[%s11 + $0x14] sm:$0xf]
    %v895 = vld [vmem:[%s11 + $0x18] sm:$0xf]
    %v896 = vld [vmem:[%s11 + $0x1c] sm:$0xf]
    %v897 = vld [vmem:[%s12] sm:$0x1]
    %v899 = vperm.slane %v897, 0
    %v909 = vunpack.c.l.b16 %v889
    %v910 = vunpack.c.l.b16 %v890
    %v911 = vunpack.c.l.b16 %v891
    %v912 = vunpack.c.l.b16 %v892
    %v913 = vunpack.c.l.b16 %v893
    %v914 = vunpack.c.l.b16 %v894
    %v915 = vunpack.c.l.b16 %v895
    %v916 = vunpack.c.l.b16 %v896
    %v917 = vpack.c.b16 %v910, %v909
    %v918 = vpack.c.b16 %v912, %v911
    %v919 = vpack.c.b16 %v914, %v913
    %v920 = vpack.c.b16 %v916, %v915
    %vm925 = vcmask 523264
    %v927 = vsel %vm925, %v888, 0
    %929 = vmatpush.bf16.msra.mxu0 0
    %930 = vmatpush.bf16.msra.mxu0 0
    %931 = vmatpush.bf16.msra.mxu0 0
    %932 = vmatpush.bf16.msra.mxu0 0
    %933 = vmatpush.bf16.msra.mxu0 %v920
    %934 = vmatpush.bf16.msra.mxu0 %v919
    %935 = vmatpush.bf16.msra.mxu0 %v918
    %936 = vmatpush.bf16.msra.mxu0 %v917
    %937 = vmatmul.bf16.gmra.mxu0 %v927
    %v938 = vpop.f32.mrf.mxu0
    %v939 = vadd.f32 %v899, %v938
    %v940 = vpop.f32.mrf.mxu0
    %v941 = vadd.f32 %v899, %v940
    %942 = vdwg.mxu0
    %v943 = vadd.f32 %v704, %v939
    %v944 = vadd.f32 %v705, %v941
    %945 = vst.msk [vmem:[#allocation7] sm:$0xff] %vm80, %v943
    %946 = vst.msk [vmem:[#allocation7 + $0x8] sm:$0xff] %vm80, %v944
    // Predicated region
    $region62: #{tpu_custom_call.1} parent=1 // pred_check
      _
    $region63: #{tpu_custom_call.1} parent=1 // pred_check_branch
      %948 = sbr.rel (0) target = $region65
    $region64: #{tpu_custom_call.1} parent=1 // pred_region
      %950 = vsyncadd [#allocation4], 0
      %s951 = sshll.u32 [#allocation7], 4
      %s952 = int_to_ptr.vmem [resolvable:$true] %s951
      %s953 = sshll.u32 %s13, 4
      %s954 = int_to_ptr.hbm [resolvable:$true] %s953
      %959 = dma.vmem_to_hbm [thread:$0]  %s952, 256, %s954, [#allocation4], 128, 128, 8
    $region65: #{tpu_custom_call.1} parent=1 // pred_fallthru
      _
    // Predicated region
    $region66: #{tpu_custom_call.1} parent=1 // pred_check
      _
    $region67: #{tpu_custom_call.1} parent=1 // pred_check_branch
      %961 = sbr.rel (0) target = $region69
    $region68: #{tpu_custom_call.1} parent=1 // pred_region
      %963 = dma.done [#allocation4], 256
    $region69: #{tpu_custom_call.1} parent=1 // pred_fallthru
      _
    %964 = vsyncpa [#allocation3], 1
    %965 = vsyncpa [#allocation6], 1
    %966 = vsyncpa [#allocation4], 1

</llo_original>
